<compile_context>
chip_gen: v6e
topology: v6e:2x2x1
jax: 0.10.0
libtpu: 0.0.40
codegen_flags: <defaults>
</compile_context>

<pallas_src>
import functools

import jax
import jax.numpy as jnp
from jax.experimental import pallas as pl
from jax.experimental.pallas import tpu as pltpu
from jax.scipy.linalg import block_diag

EPS = 1e-5
PACK = 8  # batch rows packed per lane-row (8 * 16 outputs = 128 lanes)


def _fraud_prev_kernel(x_ref, w1b_ref, pvec_ref, w2b_ref, o_ref,
                       acc_ref, bn_ref,
                       *, n_rows, rows_per_tile, hidden, out_size, need_mask):
    # pvec rows: 0 = b1 tiled x8, 1 = gamma (first `hidden` lanes),
    #            2 = beta (first `hidden` lanes), 3 = b2 tiled x8 (padded).
    p = pl.program_id(0)     # 0: batch-stats pass, 1: output pass
    i = pl.program_id(1)     # batch tile
    hid_p = PACK * hidden
    out_p = PACK * out_size

    # Layer 1 + ReLU in packed layout (recomputed in both passes; cheaper than
    # keeping all of h resident for large B).
    #   h[q, k*hidden:(k+1)*hidden] = relu(x[8q+k, :] @ w1 + b1)
    h = jnp.dot(x_ref[...], w1b_ref[...], preferred_element_type=jnp.float32)
    h = jnp.maximum(h + pvec_ref[0:1, :], 0.0)

    @pl.when(p == 0)
    def _stats_pass():
        @pl.when(i == 0)
        def _init():
            acc_ref[...] = jnp.zeros_like(acc_ref)

        if need_mask:  # static: only emit masking when B was padded
            q_idx = jax.lax.broadcasted_iota(jnp.int32, h.shape, 0)
            k_idx = jax.lax.broadcasted_iota(jnp.int32, h.shape, 1) // hidden
            rows = (i * (rows_per_tile // PACK) + q_idx) * PACK + k_idx
            hm = jnp.where(rows < n_rows, h, 0.0)
        else:
            hm = h
        acc_ref[0:1, :] += jnp.sum(hm, axis=0, keepdims=True)       # sum(h)
        acc_ref[1:2, :] += jnp.sum(hm * hm, axis=0, keepdims=True)  # sum(h^2)

    @pl.when(p == 1)
    def _output_pass():
        @pl.when(i == 0)
        def _fold_batchnorm():
            inv_n = jnp.float32(1.0 / n_rows)
            # fold[r, f] = 1 iff r % hidden == f : sums the 8 lane-chunks into
            # per-feature totals with one tiny MXU op (avoids lane slicing).
            rid = jax.lax.broadcasted_iota(jnp.int32, (hid_p, hidden), 0)
            cid = jax.lax.broadcasted_iota(jnp.int32, (hid_p, hidden), 1)
            fold = jnp.where(rid % hidden == cid, 1.0, 0.0).astype(jnp.float32)
            sums = jnp.dot(acc_ref[...], fold,
                           preferred_element_type=jnp.float32)      # [2, hidden]
            mean = sums[0:1, :] * inv_n
            var = sums[1:2, :] * inv_n - mean * mean  # biased batch variance
            scale = pvec_ref[1:2, 0:hidden] * jax.lax.rsqrt(var + EPS)
            shift = pvec_ref[2:3, 0:hidden] - mean * scale
            # spread[f, r] = 1 iff r % hidden == f : tiles scale/shift back to
            # the packed 8x layout in one tiny MXU op.
            rid2 = jax.lax.broadcasted_iota(jnp.int32, (hidden, hid_p), 0)
            cid2 = jax.lax.broadcasted_iota(jnp.int32, (hidden, hid_p), 1)
            spread = jnp.where(cid2 % hidden == rid2, 1.0, 0.0).astype(jnp.float32)
            bn_ref[...] = jnp.dot(jnp.concatenate([scale, shift], axis=0),
                                  spread, preferred_element_type=jnp.float32)

        hn = h * bn_ref[0:1, :] + bn_ref[1:2, :]
        out = jnp.dot(hn, w2b_ref[...], preferred_element_type=jnp.float32)
        o_ref[...] = jnp.maximum(out + pvec_ref[3:4, 0:out_p], 0.0)


def fraud_prev_nn(x, w1, b1, gamma, beta, w2, b2, *, block_b=16384):
    """x: [B, input_size] float32 -> [B, output_size] float32."""
    B, in_size = x.shape
    hidden = w1.shape[1]
    out_size = w2.shape[1]

    # Round the batch tile so the packed tile (tb/8 rows) is a multiple of 8
    # sublanes (tiling constraint) — also guards odd caller-supplied block_b.
    block_b = max(64, ((block_b + 63) // 64) * 64)

    if B > block_b:
        tb = block_b
        nt = -(-B // tb)
    else:
        tb = -(-B // PACK) * PACK   # single tile, rounded to a pack of 8
        nt = 1
    b_pad = nt * tb
    x_in = jnp.pad(x, ((0, b_pad - B), (0, 0))) if b_pad != B else x
    # Free row-major repack: 8 batch rows per lane-dense row.
    x_p = x_in.reshape(b_pad // PACK, PACK * in_size)

    # Block-diagonal packed weights + tiled / packed parameter vectors
    # (tiny, built once per call; single DMA each, resident for whole grid).
    w1b = block_diag(*([w1] * PACK))                 # [8*in,  8*hidden]
    w2b = block_diag(*([w2] * PACK))                 # [8*hid, 8*out]
    hid_p = PACK * hidden

    def _row(v):
        return jnp.zeros((1, hid_p), jnp.float32).at[:, :v.shape[-1]].set(v)

    pvec = jnp.concatenate([jnp.tile(b1, (1, PACK)),           # b1 tiled
                            _row(gamma), _row(beta),
                            _row(jnp.tile(b2, (1, PACK)))], axis=0)  # [4, 8*hid]

    kernel = functools.partial(
        _fraud_prev_kernel, n_rows=B, rows_per_tile=tb, hidden=hidden,
        out_size=out_size, need_mask=(b_pad != B))

    out_packed = pl.pallas_call(
        kernel,
        out_shape=jax.ShapeDtypeStruct((b_pad // PACK, PACK * out_size),
                                       jnp.float32),
        grid_spec=pltpu.PrefetchScalarGridSpec(
            num_scalar_prefetch=0,
            grid=(2, nt),    # (stats pass / output pass, batch tiles)
            in_specs=[
                pl.BlockSpec((tb // PACK, PACK * in_size),
                             lambda p, i: (i, 0)),                       # x_p
                pl.BlockSpec((PACK * in_size, hid_p),
                             lambda p, i: (0, 0)),                       # w1 blkdiag
                pl.BlockSpec((4, hid_p), lambda p, i: (0, 0)),           # packed vecs
                pl.BlockSpec((hid_p, PACK * out_size),
                             lambda p, i: (0, 0)),                       # w2 blkdiag
            ],
            # p*i: output window only advances during pass 1, so no
            # uninitialized blocks are written back to HBM during pass 0.
            out_specs=pl.BlockSpec((tb // PACK, PACK * out_size),
                                   lambda p, i: (p * i, 0)),
            scratch_shapes=[
                pltpu.VMEM((2, hid_p), jnp.float32),   # sum / sum-of-squares
                pltpu.VMEM((2, hid_p), jnp.float32),   # BN scale / shift (tiled)
            ]),
        compiler_params=pltpu.CompilerParams(
            # Both axes sequential: pass 0 fills the stats scratch that pass 1
            # consumes; megacore-sharding the batch axis would corrupt stats.
            dimension_semantics=("arbitrary", "arbitrary"),
            vmem_limit_bytes=32 * 1024 * 1024),
    )(x_p, w1b, pvec, w2b)

    # Free row-major unpack back to [B, out_size].
    out = out_packed.reshape(b_pad, out_size)
    return out[:B] if b_pad != B else out


def init_params(key, input_size, hidden_size=32, output_size=16):
    """Deterministic PyTorch-style (Kaiming-uniform) init."""
    k1, k2, k3, k4 = jax.random.split(key, 4)
    bound1 = 1.0 / jnp.sqrt(input_size)
    bound2 = 1.0 / jnp.sqrt(hidden_size)
    # Stored as [in, out] (transposed relative to PyTorch's [out, in]).
    w1 = jax.random.uniform(k1, (input_size, hidden_size), jnp.float32,
                            -bound1, bound1)
    b1 = jax.random.uniform(k2, (1, hidden_size), jnp.float32, -bound1, bound1)
    gamma = jnp.ones((1, hidden_size), jnp.float32)
    beta = jnp.zeros((1, hidden_size), jnp.float32)
    w2 = jax.random.uniform(k3, (hidden_size, output_size), jnp.float32,
                            -bound2, bound2)
    b2 = jax.random.uniform(k4, (1, output_size), jnp.float32, -bound2, bound2)
    return w1, b1, gamma, beta, w2, b2


def reference(x, w1, b1, gamma, beta, w2, b2):
    h = jnp.maximum(x @ w1 + b1, 0.0)
    mean = jnp.mean(h, axis=0, keepdims=True)
    var = jnp.mean((h - mean) ** 2, axis=0, keepdims=True)
    h = (h - mean) / jnp.sqrt(var + EPS) * gamma + beta
    return jnp.maximum(h @ w2 + b2, 0.0)


if __name__ == "__main__":
    key = jax.random.PRNGKey(0)
    kx, kx2, kp = jax.random.split(key, 3)

    input_size = 12      # number of fraud-prevention features
    hidden_size = 32
    output_size = 16
    params = init_params(kp, input_size, hidden_size, output_size)

    # 1) Small single-tile case (grid = (2, 1)).
    batch = 8
    x = jax.random.normal(kx, (batch, input_size), jnp.float32)
    out = jax.block_until_ready(fraud_prev_nn(x, *params))
    ref = reference(x, *params)
    assert out.shape == (batch, output_size)
    assert jnp.allclose(out, ref, atol=1e-4, rtol=1e-4), \
        float(jnp.max(jnp.abs(out - ref)))

    # 2) Multi-tile + padded case: B=200, tile=64 -> 4 tiles, 56 masked rows.
    batch2 = 200
    x2 = jax.random.normal(kx2, (batch2, input_size), jnp.float32)
    out2 = jax.block_until_ready(fraud_prev_nn(x2, *params, block_b=64))
    ref2 = reference(x2, *params)
    assert out2.shape == (batch2, output_size)
    assert jnp.allclose(out2, ref2, atol=1e-4, rtol=1e-4), \
        float(jnp.max(jnp.abs(out2 - ref2)))

    print("KERNEL_OK")
</pallas_src>

<mosaic_0001>
module attributes {stable_mosaic.version = 11 : i64} {
  func.func @_fraud_prev_kernel(%arg0: i32, %arg1: i32, %arg2: memref<1x96xf32, #tpu.memory_space<vmem>>, %arg3: memref<96x256xf32, #tpu.memory_space<vmem>>, %arg4: memref<4x256xf32, #tpu.memory_space<vmem>>, %arg5: memref<256x128xf32, #tpu.memory_space<vmem>>, %arg6: memref<1x128xf32, #tpu.memory_space<vmem>>, %arg7: memref<2x256xf32, #tpu.memory_space<vmem>>, %arg8: memref<2x256xf32, #tpu.memory_space<vmem>>) attributes {dimension_semantics = [#tpu.dimension_semantics<arbitrary>, #tpu.dimension_semantics<arbitrary>], iteration_bounds = array<i64: 2, 1>, scalar_prefetch = 0 : i64, scratch_operands = 2 : i64, tpu.core_type = #tpu.core_type<tc>, window_params = [{transform_indices = @transform_0, window_bounds = array<i64: 1, 96>}, {pipeline_mode = #tpu.pipeline_mode<synchronous>, transform_indices = @transform_1, window_bounds = array<i64: 96, 256>}, {pipeline_mode = #tpu.pipeline_mode<synchronous>, transform_indices = @transform_2, window_bounds = array<i64: 4, 256>}, {pipeline_mode = #tpu.pipeline_mode<synchronous>, transform_indices = @transform_3, window_bounds = array<i64: 256, 128>}, {transform_indices = @transform_4, window_bounds = array<i64: 1, 128>}]} {
    %c0 = arith.constant 0 : index
    %c0_0 = arith.constant 0 : index
    %0 = vector.load %arg2[%c0, %c0_0] : memref<1x96xf32, #tpu.memory_space<vmem>>, vector<1x96xf32>
    %c0_1 = arith.constant 0 : index
    %c0_2 = arith.constant 0 : index
    %1 = vector.load %arg3[%c0_1, %c0_2] : memref<96x256xf32, #tpu.memory_space<vmem>>, vector<96x256xf32>
    %cst = arith.constant dense<0.000000e+00> : vector<1x256xf32>
    %2 = tpu.matmul %0, %1, %cst {dimension_numbers = #tpu.dot_dimension_numbers<[1], [0], [0], [1], [0, 0, 1, 1], [], []>} : vector<1x96xf32>, vector<96x256xf32>, vector<1x256xf32> -> vector<1x256xf32>
    %c0_3 = arith.constant 0 : index
    %c0_4 = arith.constant 0 : index
    %3 = vector.load %arg4[%c0_3, %c0_4] : memref<4x256xf32, #tpu.memory_space<vmem>>, vector<1x256xf32>
    %4 = arith.addf %2, %3 : vector<1x256xf32>
    %cst_5 = arith.constant 0.000000e+00 : f32
    %5 = vector.broadcast %cst_5 : f32 to vector<1x256xf32>
    %6 = arith.maximumf %4, %5 : vector<1x256xf32>
    %c0_i32 = arith.constant 0 : i32
    %7 = arith.cmpi eq, %arg0, %c0_i32 : i32
    %8 = arith.extui %7 : i1 to i32
    %c0_i32_6 = arith.constant 0 : i32
    %9 = arith.cmpi ne, %8, %c0_i32_6 : i32
    scf.if %9 {
      %c0_i32_8 = arith.constant 0 : i32
      %13 = arith.cmpi eq, %arg1, %c0_i32_8 : i32
      %14 = arith.extui %13 : i1 to i32
      %c0_i32_9 = arith.constant 0 : i32
      %15 = arith.cmpi ne, %14, %c0_i32_9 : i32
      scf.if %15 {
        %cst_19 = arith.constant 0.000000e+00 : f32
        %27 = vector.broadcast %cst_19 : f32 to vector<2x256xf32>
        %c0_20 = arith.constant 0 : index
        %c0_21 = arith.constant 0 : index
        %28 = vector.load %arg7[%c0_20, %c0_21] : memref<2x256xf32, #tpu.memory_space<vmem>>, vector<2x256xf32>
        tpu.vector_store %arg7[%c0_20, %c0_21], %27 {strides = array<i32>} : memref<2x256xf32, #tpu.memory_space<vmem>>, vector<2x256xf32>,
      } else {
      }
      %c0_10 = arith.constant 0 : index
      %c0_11 = arith.constant 0 : index
      %16 = vector.load %arg7[%c0_10, %c0_11] : memref<2x256xf32, #tpu.memory_space<vmem>>, vector<1x256xf32>
      %cst_12 = arith.constant dense<0.000000e+00> : vector<256xf32>
      %17 = vector.multi_reduction <add>, %6, %cst_12 [0] : vector<1x256xf32> to vector<256xf32>
      %18 = vector.shape_cast %17 : vector<256xf32> to vector<1x256xf32>
      %19 = arith.addf %16, %18 : vector<1x256xf32>
      %c0_13 = arith.constant 0 : index
      %c0_14 = arith.constant 0 : index
      %20 = vector.load %arg7[%c0_13, %c0_14] : memref<2x256xf32, #tpu.memory_space<vmem>>, vector<1x256xf32>
      tpu.vector_store %arg7[%c0_13, %c0_14], %19 {strides = array<i32>} : memref<2x256xf32, #tpu.memory_space<vmem>>, vector<1x256xf32>,
      %c1 = arith.constant 1 : index
      %c0_15 = arith.constant 0 : index
      %21 = vector.load %arg7[%c1, %c0_15] : memref<2x256xf32, #tpu.memory_space<vmem>>, vector<1x256xf32>
      %22 = arith.mulf %6, %6 : vector<1x256xf32>
      %cst_16 = arith.constant dense<0.000000e+00> : vector<256xf32>
      %23 = vector.multi_reduction <add>, %22, %cst_16 [0] : vector<1x256xf32> to vector<256xf32>
      %24 = vector.shape_cast %23 : vector<256xf32> to vector<1x256xf32>
      %25 = arith.addf %21, %24 : vector<1x256xf32>
      %c1_17 = arith.constant 1 : index
      %c0_18 = arith.constant 0 : index
      %26 = vector.load %arg7[%c1_17, %c0_18] : memref<2x256xf32, #tpu.memory_space<vmem>>, vector<1x256xf32>
      tpu.vector_store %arg7[%c1_17, %c0_18], %25 {strides = array<i32>} : memref<2x256xf32, #tpu.memory_space<vmem>>, vector<1x256xf32>,
    } else {
    }
    %c1_i32 = arith.constant 1 : i32
    %10 = arith.cmpi eq, %arg0, %c1_i32 : i32
    %11 = arith.extui %10 : i1 to i32
    %c0_i32_7 = arith.constant 0 : i32
    %12 = arith.cmpi ne, %11, %c0_i32_7 : i32
    scf.if %12 {
      %c0_i32_8 = arith.constant 0 : i32
      %13 = arith.cmpi eq, %arg1, %c0_i32_8 : i32
      %14 = arith.extui %13 : i1 to i32
      %c0_i32_9 = arith.constant 0 : i32
      %15 = arith.cmpi ne, %14, %c0_i32_9 : i32
      scf.if %15 {
        %27 = tpu.iota {dimensions = array<i32: 0>} : vector<256x32xi32>
        %28 = tpu.iota {dimensions = array<i32: 1>} : vector<256x32xi32>
        %c32_i32 = arith.constant 32 : i32
        %c0_i32_20 = arith.constant 0 : i32
        %29 = arith.cmpi eq, %c32_i32, %c0_i32_20 : i32
        %c1_i32_21 = arith.constant 1 : i32
        %30 = arith.select %29, %c1_i32_21, %c32_i32 : i32
        %31 = vector.broadcast %30 : i32 to vector<256x32xi32>
        %32 = arith.remsi %27, %31 : vector<256x32xi32>
        %c0_i32_22 = arith.constant 0 : i32
        %33 = vector.broadcast %c0_i32_22 : i32 to vector<256x32xi32>
        %34 = arith.cmpi ne, %32, %33 : vector<256x32xi32>
        %c0_i32_23 = arith.constant 0 : i32
        %35 = vector.broadcast %c0_i32_23 : i32 to vector<256x32xi32>
        %36 = arith.cmpi slt, %32, %35 : vector<256x32xi32>
        %c0_i32_24 = arith.constant 0 : i32
        %37 = arith.cmpi slt, %30, %c0_i32_24 : i32
        %38 = vector.broadcast %37 : i1 to vector<256x32xi1>
        %39 = vector.broadcast %38 : vector<256x32xi1> to vector<256x32xi1>
        %40 = arith.xori %36, %39 : vector<256x32xi1>
        %41 = arith.andi %40, %34 : vector<256x32xi1>
        %42 = vector.broadcast %30 : i32 to vector<256x32xi32>
        %43 = arith.addi %32, %42 : vector<256x32xi32>
        %44 = arith.select %41, %43, %32 : vector<256x32xi1>, vector<256x32xi32>
        %45 = arith.cmpi eq, %44, %28 : vector<256x32xi32>
        %cst_25 = arith.constant 1.000000e+00 : f32
        %cst_26 = arith.constant 0.000000e+00 : f32
        %46 = vector.broadcast %cst_25 : f32 to vector<256x32xf32>
        %47 = vector.broadcast %cst_26 : f32 to vector<256x32xf32>
        %48 = arith.select %45, %46, %47 : vector<256x32xi1>, vector<256x32xf32>
        %c0_27 = arith.constant 0 : index
        %c0_28 = arith.constant 0 : index
        %49 = vector.load %arg7[%c0_27, %c0_28] : memref<2x256xf32, #tpu.memory_space<vmem>>, vector<2x256xf32>
        %cst_29 = arith.constant dense<0.000000e+00> : vector<2x32xf32>
        %50 = tpu.matmul %49, %48, %cst_29 {dimension_numbers = #tpu.dot_dimension_numbers<[1], [0], [0], [1], [0, 0, 1, 1], [], []>} : vector<2x256xf32>, vector<256x32xf32>, vector<2x32xf32> -> vector<2x32xf32>
        %51 = vector.extract_strided_slice %50 {offsets = [0, 0], sizes = [1, 32], strides = [1, 1]} : vector<2x32xf32> to vector<1x32xf32>
        %cst_30 = arith.constant 1.250000e-01 : f32
        %52 = vector.broadcast %cst_30 : f32 to vector<1x32xf32>
        %53 = arith.mulf %51, %52 : vector<1x32xf32>
        %54 = vector.extract_strided_slice %50 {offsets = [1, 0], sizes = [1, 32], strides = [1, 1]} : vector<2x32xf32> to vector<1x32xf32>
        %cst_31 = arith.constant 1.250000e-01 : f32
        %55 = vector.broadcast %cst_31 : f32 to vector<1x32xf32>
        %56 = arith.mulf %54, %55 : vector<1x32xf32>
        %57 = arith.mulf %53, %53 : vector<1x32xf32>
        %58 = arith.subf %56, %57 : vector<1x32xf32>
        %c1_32 = arith.constant 1 : index
        %c0_33 = arith.constant 0 : index
        %59 = vector.load %arg4[%c1_32, %c0_33] : memref<4x256xf32, #tpu.memory_space<vmem>>, vector<1x32xf32>
        %cst_34 = arith.constant 9.99999974E-6 : f32
        %60 = vector.broadcast %cst_34 : f32 to vector<1x32xf32>
        %61 = arith.addf %58, %60 : vector<1x32xf32>
        %62 = math.rsqrt %61 : vector<1x32xf32>
        %63 = arith.mulf %59, %62 : vector<1x32xf32>
        %c2 = arith.constant 2 : index
        %c0_35 = arith.constant 0 : index
        %64 = vector.load %arg4[%c2, %c0_35] : memref<4x256xf32, #tpu.memory_space<vmem>>, vector<1x32xf32>
        %65 = arith.mulf %53, %63 : vector<1x32xf32>
        %66 = arith.subf %64, %65 : vector<1x32xf32>
        %67 = tpu.iota {dimensions = array<i32: 0>} : vector<32x256xi32>
        %68 = tpu.iota {dimensions = array<i32: 1>} : vector<32x256xi32>
        %c32_i32_36 = arith.constant 32 : i32
        %c0_i32_37 = arith.constant 0 : i32
        %69 = arith.cmpi eq, %c32_i32_36, %c0_i32_37 : i32
        %c1_i32_38 = arith.constant 1 : i32
        %70 = arith.select %69, %c1_i32_38, %c32_i32_36 : i32
        %71 = vector.broadcast %70 : i32 to vector<32x256xi32>
        %72 = arith.remsi %68, %71 : vector<32x256xi32>
        %c0_i32_39 = arith.constant 0 : i32
        %73 = vector.broadcast %c0_i32_39 : i32 to vector<32x256xi32>
        %74 = arith.cmpi ne, %72, %73 : vector<32x256xi32>
        %c0_i32_40 = arith.constant 0 : i32
        %75 = vector.broadcast %c0_i32_40 : i32 to vector<32x256xi32>
        %76 = arith.cmpi slt, %72, %75 : vector<32x256xi32>
        %c0_i32_41 = arith.constant 0 : i32
        %77 = arith.cmpi slt, %70, %c0_i32_41 : i32
        %78 = vector.broadcast %77 : i1 to vector<32x256xi1>
        %79 = vector.broadcast %78 : vector<32x256xi1> to vector<32x256xi1>
        %80 = arith.xori %76, %79 : vector<32x256xi1>
        %81 = arith.andi %80, %74 : vector<32x256xi1>
        %82 = vector.broadcast %70 : i32 to vector<32x256xi32>
        %83 = arith.addi %72, %82 : vector<32x256xi32>
        %84 = arith.select %81, %83, %72 : vector<32x256xi1>, vector<32x256xi32>
        %85 = arith.cmpi eq, %84, %67 : vector<32x256xi32>
        %cst_42 = arith.constant 1.000000e+00 : f32
        %cst_43 = arith.constant 0.000000e+00 : f32
        %86 = vector.broadcast %cst_42 : f32 to vector<32x256xf32>
        %87 = vector.broadcast %cst_43 : f32 to vector<32x256xf32>
        %88 = arith.select %85, %86, %87 : vector<32x256xi1>, vector<32x256xf32>
        %89 = tpu.concatenate %63, %66 in 0 : vector<1x32xf32>, vector<1x32xf32> -> vector<2x32xf32>
        %cst_44 = arith.constant dense<0.000000e+00> : vector<2x256xf32>
        %90 = tpu.matmul %89, %88, %cst_44 {dimension_numbers = #tpu.dot_dimension_numbers<[1], [0], [0], [1], [0, 0, 1, 1], [], []>} : vector<2x32xf32>, vector<32x256xf32>, vector<2x256xf32> -> vector<2x256xf32>
        %c0_45 = arith.constant 0 : index
        %c0_46 = arith.constant 0 : index
        %91 = vector.load %arg8[%c0_45, %c0_46] : memref<2x256xf32, #tpu.memory_space<vmem>>, vector<2x256xf32>
        tpu.vector_store %arg8[%c0_45, %c0_46], %90 {strides = array<i32>} : memref<2x256xf32, #tpu.memory_space<vmem>>, vector<2x256xf32>,
      } else {
      }
      %c0_10 = arith.constant 0 : index
      %c0_11 = arith.constant 0 : index
      %16 = vector.load %arg8[%c0_10, %c0_11] : memref<2x256xf32, #tpu.memory_space<vmem>>, vector<1x256xf32>
      %17 = arith.mulf %6, %16 : vector<1x256xf32>
      %c1 = arith.constant 1 : index
      %c0_12 = arith.constant 0 : index
      %18 = vector.load %arg8[%c1, %c0_12] : memref<2x256xf32, #tpu.memory_space<vmem>>, vector<1x256xf32>
      %19 = arith.addf %17, %18 : vector<1x256xf32>
      %c0_13 = arith.constant 0 : index
      %c0_14 = arith.constant 0 : index
      %20 = vector.load %arg5[%c0_13, %c0_14] : memref<256x128xf32, #tpu.memory_space<vmem>>, vector<256x128xf32>
      %cst_15 = arith.constant dense<0.000000e+00> : vector<1x128xf32>
      %21 = tpu.matmul %19, %20, %cst_15 {dimension_numbers = #tpu.dot_dimension_numbers<[1], [0], [0], [1], [0, 0, 1, 1], [], []>} : vector<1x256xf32>, vector<256x128xf32>, vector<1x128xf32> -> vector<1x128xf32>
      %c3 = arith.constant 3 : index
      %c0_16 = arith.constant 0 : index
      %22 = vector.load %arg4[%c3, %c0_16] : memref<4x256xf32, #tpu.memory_space<vmem>>, vector<1x128xf32>
      %23 = arith.addf %21, %22 : vector<1x128xf32>
      %cst_17 = arith.constant 0.000000e+00 : f32
      %24 = vector.broadcast %cst_17 : f32 to vector<1x128xf32>
      %25 = arith.maximumf %23, %24 : vector<1x128xf32>
      %c0_18 = arith.constant 0 : index
      %c0_19 = arith.constant 0 : index
      %26 = vector.load %arg6[%c0_18, %c0_19] : memref<1x128xf32, #tpu.memory_space<vmem>>, vector<1x128xf32>
      tpu.vector_store %arg6[%c0_18, %c0_19], %25 {strides = array<i32>} : memref<1x128xf32, #tpu.memory_space<vmem>>, vector<1x128xf32>,
    } else {
    }
    return
  }
  func.func @transform_0(%arg0: i32, %arg1: i32) -> (i32, i32) {
    %c0_i32 = arith.constant 0 : i32
    %c0_i32_0 = arith.constant 0 : i32
    return %arg1, %c0_i32 : i32, i32
  }
  func.func @transform_1(%arg0: i32, %arg1: i32) -> (i32, i32) {
    %c0_i32 = arith.constant 0 : i32
    %c0_i32_0 = arith.constant 0 : i32
    %c0_i32_1 = arith.constant 0 : i32
    return %c0_i32, %c0_i32_0 : i32, i32
  }
  func.func @transform_2(%arg0: i32, %arg1: i32) -> (i32, i32) {
    %c0_i32 = arith.constant 0 : i32
    %c0_i32_0 = arith.constant 0 : i32
    %c0_i32_1 = arith.constant 0 : i32
    return %c0_i32, %c0_i32_0 : i32, i32
  }
  func.func @transform_3(%arg0: i32, %arg1: i32) -> (i32, i32) {
    %c0_i32 = arith.constant 0 : i32
    %c0_i32_0 = arith.constant 0 : i32
    %c0_i32_1 = arith.constant 0 : i32
    return %c0_i32, %c0_i32_0 : i32, i32
  }
  func.func @transform_4(%arg0: i32, %arg1: i32) -> (i32, i32) {
    %0 = arith.muli %arg0, %arg1 : i32
    %c0_i32 = arith.constant 0 : i32
    %c0_i32_0 = arith.constant 0 : i32
    return %0, %c0_i32 : i32, i32
  }
}

</mosaic_0001>

<llo_original>
// kernel: tpu_custom_call.1
$region0: #{tpu_custom_call.1}
  #allocation0 [shape = 'u32[]', space=smem, size = 0x4, offset = 0x4, fixed_abs, tag = 'smem constant byte address 0x4 - core index']
  #allocation1 [shape = 'u32[144,128]{1,0:T(1,128)}', space=vmem, size = 0x12000, scoped, tag = 'internal scratch']
  #allocation2 [shape = 'f32[2,256]{1,0:T(2,128)}', space=vmem, size = 0x800, scoped, tag = 'scratch operand']
  #allocation3 [shape = 'f32[2,256]{1,0:T(2,128)}', space=vmem, size = 0x800, scoped, tag = 'scratch operand']
  %s0 = inlined_call_operand.hbm [shape: f32[1,96], index: 0, kind: input, shape index: {}]
  %s1 = inlined_call_operand.hbm [shape: f32[96,256], index: 1, kind: input, shape index: {}]
  %s2 = inlined_call_operand.hbm [shape: f32[4,256], index: 2, kind: input, shape index: {}]
  %s3 = inlined_call_operand.hbm [shape: f32[256,128], index: 3, kind: input, shape index: {}]
  %s4 = inlined_call_operand.hbm [shape: f32[1,128], index: 4, kind: output, shape index: {}]
  %s5 = sld [smem:[#allocation0]]
  $region81: #{tpu_custom_call.1} parent=0
    _
  %s7 = ssub.s32 1, %s5
  %s8 = scalar_select 0, %s7, %s5
  $region1: #{tpu_custom_call.1} parent=0
    #allocation4 [shape = 'u8[512]{0}', space=vmem, size = 0x400, scoped, tag = 'input window, operand 0, single buffered']
    #allocation5 [shape = 's32[2]{0}', space=sflag, size = 0x8, scoped, tag = 'scoped memory for tpu_custom_call.1']
    #allocation6 [shape = 's32[2]{0}', space=sflag, size = 0x8, scoped, tag = 'scoped memory for tpu_custom_call.1']
    #allocation7 [shape = 'u8[98304]{0}', space=vmem, size = 0x18000, scoped, tag = 'input window, operand 1, single buffered']
    #allocation8 [shape = 's32[1]{0}', space=sflag, size = 0x4, scoped, tag = 'scoped memory for tpu_custom_call.1']
    #allocation9 [shape = 'u8[4096]{0}', space=vmem, size = 0x1000, scoped, tag = 'input window, operand 2, single buffered']
    #allocation10 [shape = 'u8[131072]{0}', space=vmem, size = 0x20000, scoped, tag = 'input window, operand 3, single buffered']
    #allocation11 [shape = 's32[1]{0}', space=sflag, size = 0x4, scoped, tag = 'scoped memory for tpu_custom_call.1']
    #allocation12 [shape = 'u8[1024]{0}', space=vmem, size = 0x400, scoped, tag = 'output window, operand 0']
    %9 = vsyncpa [#allocation5], 0
    %10 = vsyncpa [#allocation8], 0
    %11 = vsyncpa [#allocation11], 0
    %12 = vsyncpa [#allocation6], 0
    %s13 = scalar_lea.sflag [#allocation6], 1
    %14 = vsyncpa %s13, 0
    loop: start=0, step=1, limit=4
    $region2: #{tpu_custom_call.1} parent=1 // loop_pre_header
      _
    $region3: #{tpu_custom_call.1} parent=1 // loop_header
      %s16 = sphi 0, %s20
      %p17 = scmp.ge.s32.totalorder %s16, 4
      %s23 = sphi 0, %s35
      %s24 = sphi 0, %s31
      %s25 = sphi 0, %s23
      %s26 = sphi 0, %s24
      %s27 = sphi 0, %s25
      %s28 = sphi 0, %s26
      %s38 = sphi 0, %s40
      %s41 = sphi 0, %s38
      %s42 = sphi 0, %s41
      %s58 = sphi 0, %s42
      %s62 = sphi 0, %s62
      %s64 = sphi 0, %s62
      %s65 = sphi 0, %s64
      %s79 = sphi 0, %s65
      %s83 = sphi 0, %s83
      %s85 = sphi 0, %s83
      %s86 = sphi 0, %s85
      %s100 = sphi 0, %s86
      %s104 = sphi 0, %s104
      %s106 = sphi 0, %s104
      %s107 = sphi 0, %s106
      %s121 = sphi 0, %s107
      %s129 = sphi 0, %s131
      %s132 = sphi 0, %s129
      %s133 = sphi 0, %s132
      %s149 = sphi 0, %s133
    $region4: #{tpu_custom_call.1} parent=1 // loop_header_branch
      %19 = sbr.rel (%p17) target = $region8
    $region5: #{tpu_custom_call.1} parent=1 // loop_body
      %s21 = ssub.s32 %s16, 1
      %s22 = ssub.s32 %s16, 2
      %s29 = sadd.s32 1, %s24
      %p30 = scmp.ge.s32.totalorder %s29, 1
      %s31 = scalar_select %p30, 0, %s29
      %s32 = sadd.s32 1, %s23
      %s33 = scalar_select %p30, %s32, %s23
      %p34 = scmp.ge.s32.totalorder %s33, 2
      %s35 = scalar_select %p34, 0, %s33
      %s36 = ssub.s32 %s24, %s31
      %p37 = scmp.eq.s32.totalorder %s36, 0
      %s39 = sadd.s32 %s38, 1
      %s40 = scalar_select %p37, %s38, %s39
      %p43 = pneg %p37
      %p44 = scmp.eq.s32.totalorder %s16, 1
      %p45 = por %p43, %p44
      %p46 = scmp.ne.s32.totalorder %s38, %s41
      %p47 = scmp.eq.s32.totalorder %s16, 0
      %p48 = por %p46, %p47
      %p49 = scmp.ne.s32.totalorder %s38, %s41
      %p50 = scmp.eq.s32.totalorder %s21, 1
      %p51 = por %p49, %p50
      %p52 = scmp.ne.s32.totalorder %s41, %s42
      %p53 = scmp.eq.s32.totalorder %s21, 0
      %p54 = por %p52, %p53
      %p55 = scmp.ne.s32.totalorder %s41, %s42
      %p56 = scmp.eq.s32.totalorder %s22, 1
      %p57 = por %p55, %p56
      %p59 = scmp.ne.s32.totalorder %s42, %s58
      %p60 = scmp.eq.s32.totalorder %s22, 0
      %p61 = por %p59, %p60
      %s63 = sadd.s32 %s62, 1
      %p66 = scmp.eq.s32.totalorder %s16, 1
      %p67 = scmp.ne.s32.totalorder %s62, %s64
      %p68 = scmp.eq.s32.totalorder %s16, 0
      %p69 = por %p67, %p68
      %p70 = scmp.ne.s32.totalorder %s62, %s64
      %p71 = scmp.eq.s32.totalorder %s21, 1
      %p72 = por %p70, %p71
      %p73 = scmp.ne.s32.totalorder %s64, %s65
      %p74 = scmp.eq.s32.totalorder %s21, 0
      %p75 = por %p73, %p74
      %p76 = scmp.ne.s32.totalorder %s64, %s65
      %p77 = scmp.eq.s32.totalorder %s22, 1
      %p78 = por %p76, %p77
      %p80 = scmp.ne.s32.totalorder %s65, %s79
      %p81 = scmp.eq.s32.totalorder %s22, 0
      %p82 = por %p80, %p81
      %s84 = sadd.s32 %s83, 1
      %p87 = scmp.eq.s32.totalorder %s16, 1
      %p88 = scmp.ne.s32.totalorder %s83, %s85
      %p89 = scmp.eq.s32.totalorder %s16, 0
      %p90 = por %p88, %p89
      %p91 = scmp.ne.s32.totalorder %s83, %s85
      %p92 = scmp.eq.s32.totalorder %s21, 1
      %p93 = por %p91, %p92
      %p94 = scmp.ne.s32.totalorder %s85, %s86
      %p95 = scmp.eq.s32.totalorder %s21, 0
      %p96 = por %p94, %p95
      %p97 = scmp.ne.s32.totalorder %s85, %s86
      %p98 = scmp.eq.s32.totalorder %s22, 1
      %p99 = por %p97, %p98
      %p101 = scmp.ne.s32.totalorder %s86, %s100
      %p102 = scmp.eq.s32.totalorder %s22, 0
      %p103 = por %p101, %p102
      %s105 = sadd.s32 %s104, 1
      %p108 = scmp.eq.s32.totalorder %s16, 1
      %p109 = scmp.ne.s32.totalorder %s104, %s106
      %p110 = scmp.eq.s32.totalorder %s16, 0
      %p111 = por %p109, %p110
      %p112 = scmp.ne.s32.totalorder %s104, %s106
      %p113 = scmp.eq.s32.totalorder %s21, 1
      %p114 = por %p112, %p113
      %p115 = scmp.ne.s32.totalorder %s106, %s107
      %p116 = scmp.eq.s32.totalorder %s21, 0
      %p117 = por %p115, %p116
      %p118 = scmp.ne.s32.totalorder %s106, %s107
      %p119 = scmp.eq.s32.totalorder %s22, 1
      %p120 = por %p118, %p119
      %p122 = scmp.ne.s32.totalorder %s107, %s121
      %p123 = scmp.eq.s32.totalorder %s22, 0
      %p124 = por %p122, %p123
      %s125 = smul.u32 %s23, %s24
      %s126 = smul.u32 %s35, %s31
      %s127 = ssub.s32 %s125, %s126
      %p128 = scmp.eq.s32.totalorder %s127, 0
      %s130 = sadd.s32 %s129, 1
      %s131 = scalar_select %p128, %s129, %s130
      %p134 = pneg %p128
      %p135 = scmp.eq.s32.totalorder %s16, 1
      %p136 = por %p134, %p135
      %p137 = scmp.ne.s32.totalorder %s129, %s132
      %p138 = scmp.eq.s32.totalorder %s16, 0
      %p139 = por %p137, %p138
      %p140 = scmp.ne.s32.totalorder %s129, %s132
      %p141 = scmp.eq.s32.totalorder %s21, 1
      %p142 = por %p140, %p141
      %p143 = scmp.ne.s32.totalorder %s132, %s133
      %p144 = scmp.eq.s32.totalorder %s21, 0
      %p145 = por %p143, %p144
      %p146 = scmp.ne.s32.totalorder %s132, %s133
      %p147 = scmp.eq.s32.totalorder %s22, 1
      %p148 = por %p146, %p147
      %p150 = scmp.ne.s32.totalorder %s133, %s149
      %p151 = scmp.eq.s32.totalorder %s22, 0
      %p152 = por %p150, %p151
      %p153 = scmp.le.s32.totalorder 1, %s16
      %p154 = scmp.lt.s32.totalorder %s16, 3
      %p155 = pnand %p153, %p154
      %p156 = pneg %p155
      // Predicated region
      $region9: #{tpu_custom_call.1} parent=5 // pred_check
        _
      $region10: #{tpu_custom_call.1} parent=5 // pred_check_branch
        %158 = sbr.rel (%p155) target = $region12
      $region11: #{tpu_custom_call.1} parent=5 // pred_region
        %s159 = ssub.s32 %s16, 1
        // Predicated region
        $region13: #{tpu_custom_call.1} parent=11 // pred_check
          %p160 = pneg %p54
        $region14: #{tpu_custom_call.1} parent=11 // pred_check_branch
          %162 = sbr.rel (%p160) target = $region16
        $region15: #{tpu_custom_call.1} parent=11 // pred_region
          %s164 = ssub.s32 16, 16
          %165 = vsyncadd [#allocation5], %s164
          %s166 = smul.addr %s26, 16
          %s167 = scalar_lea.hbm %s0, %s166
          %s169 = sshll.u32 [#allocation4], 4
          %s170 = int_to_ptr.vmem [resolvable:$true] %s169
          %172 = dma.hbm_to_vmem [thread:$0]  %s167, 16, %s170, [#allocation5]
        $region16: #{tpu_custom_call.1} parent=11 // pred_fallthru
          _
        // Predicated region
        $region17: #{tpu_custom_call.1} parent=11 // pred_check
          %p173 = pneg %p75
        $region18: #{tpu_custom_call.1} parent=11 // pred_check_branch
          %175 = sbr.rel (%p173) target = $region20
        $region19: #{tpu_custom_call.1} parent=11 // pred_region
          %s177 = ssub.s32 3072, 3072
          %178 = vsyncadd [#allocation8], %s177
          %s179 = sshll.u32 [#allocation7], 4
          %s180 = int_to_ptr.vmem [resolvable:$true] %s179
          %185 = dma.hbm_to_vmem [thread:$0]  %s1, 3072, %s180, [#allocation8], 256, 256, 16
        $region20: #{tpu_custom_call.1} parent=11 // pred_fallthru
          _
        // Predicated region
        $region21: #{tpu_custom_call.1} parent=11 // pred_check
          %p186 = pneg %p96
        $region22: #{tpu_custom_call.1} parent=11 // pred_check_branch
          %188 = sbr.rel (%p186) target = $region24
        $region23: #{tpu_custom_call.1} parent=11 // pred_region
          %s190 = ssub.s32 128, 128
          %191 = vsyncadd [#allocation8], %s190
          %s193 = sshll.u32 [#allocation9], 4
          %s194 = int_to_ptr.vmem [resolvable:$true] %s193
          %196 = dma.hbm_to_vmem [thread:$0]  %s2, 128, %s194, [#allocation8]
        $region24: #{tpu_custom_call.1} parent=11 // pred_fallthru
          _
        // Predicated region
        $region25: #{tpu_custom_call.1} parent=11 // pred_check
          %p197 = pneg %p117
        $region26: #{tpu_custom_call.1} parent=11 // pred_check_branch
          %199 = sbr.rel (%p197) target = $region28
        $region27: #{tpu_custom_call.1} parent=11 // pred_region
          %s201 = ssub.s32 4096, 4096
          %202 = vsyncadd [#allocation11], %s201
          %s203 = sshll.u32 [#allocation10], 4
          %s204 = int_to_ptr.vmem [resolvable:$true] %s203
          %209 = dma.hbm_to_vmem [thread:$0]  %s3, 4096, %s204, [#allocation11], 128, 128, 8
        $region28: #{tpu_custom_call.1} parent=11 // pred_fallthru
          _
      $region12: #{tpu_custom_call.1} parent=5 // pred_fallthru
        _
      %p210 = scmp.lt.s32.totalorder %s16, 2
      // Predicated region
      $region29: #{tpu_custom_call.1} parent=5 // pred_check
        %p211 = pneg %p210
      $region30: #{tpu_custom_call.1} parent=5 // pred_check_branch
        %213 = sbr.rel (%p211) target = $region32
      $region31: #{tpu_custom_call.1} parent=5 // pred_region
        _
      $region32: #{tpu_custom_call.1} parent=5 // pred_fallthru
        _
      %p214 = scmp.le.s32.totalorder 1, %s16
      %p215 = scmp.lt.s32.totalorder %s16, 3
      %p216 = pnand %p214, %p215
      %p217 = pneg %p216
      // Predicated region
      $region33: #{tpu_custom_call.1} parent=5 // pred_check
        _
      $region34: #{tpu_custom_call.1} parent=5 // pred_check_branch
        %219 = sbr.rel (%p216) target = $region36
      $region35: #{tpu_custom_call.1} parent=5 // pred_region
        %s220 = ssub.s32 %s16, 1
        // Predicated region
        $region37: #{tpu_custom_call.1} parent=35 // pred_check
          %p221 = pneg %p54
        $region38: #{tpu_custom_call.1} parent=35 // pred_check_branch
          %223 = sbr.rel (%p221) target = $region40
        $region39: #{tpu_custom_call.1} parent=35 // pred_region
          %224 = dma.done [#allocation5], 16
        $region40: #{tpu_custom_call.1} parent=35 // pred_fallthru
          _
        // Predicated region
        $region41: #{tpu_custom_call.1} parent=35 // pred_check
          %p225 = pneg %p75
        $region42: #{tpu_custom_call.1} parent=35 // pred_check_branch
          %227 = sbr.rel (%p225) target = $region44
        $region43: #{tpu_custom_call.1} parent=35 // pred_region
          %228 = dma.done [#allocation8], 3072
        $region44: #{tpu_custom_call.1} parent=35 // pred_fallthru
          _
        // Predicated region
        $region45: #{tpu_custom_call.1} parent=35 // pred_check
          %p229 = pneg %p96
        $region46: #{tpu_custom_call.1} parent=35 // pred_check_branch
          %231 = sbr.rel (%p229) target = $region48
        $region47: #{tpu_custom_call.1} parent=35 // pred_region
          %232 = dma.done [#allocation8], 128
        $region48: #{tpu_custom_call.1} parent=35 // pred_fallthru
          _
        // Predicated region
        $region49: #{tpu_custom_call.1} parent=35 // pred_check
          %p233 = pneg %p117
        $region50: #{tpu_custom_call.1} parent=35 // pred_check_branch
          %235 = sbr.rel (%p233) target = $region52
        $region51: #{tpu_custom_call.1} parent=35 // pred_region
          %236 = dma.done [#allocation11], 4096
        $region52: #{tpu_custom_call.1} parent=35 // pred_fallthru
          _
        %p237 = pneg %p54
        %p238 = pneg %p51
        %p239 = pneg %p75
        %p240 = pneg %p72
        %p241 = pneg %p96
        %p242 = pneg %p93
        %p243 = pneg %p117
        %p244 = pneg %p114
        %p245 = pneg %p145
        %p246 = pneg %p142
        %s247 = sand.u32 %s132, 1
        %s248 = scalar_lea.sflag [#allocation6], %s247
        %s249 = sand.u32 %s132, 1
        %s250 = scalar_lea.vmem [#allocation12], %s249
        %s251 = smul.u32 %s25, %s26
        %v252 = vld [vmem:[#allocation4] sm:$0x1]
        %v253 = vld [vmem:[#allocation7] sm:$0xff]
        %v254 = vld [vmem:[#allocation7 + $0x8] sm:$0xff]
        %v255 = vld [vmem:[#allocation7 + $0x10] sm:$0xff]
        %v256 = vld [vmem:[#allocation7 + $0x18] sm:$0xff]
        %v257 = vld [vmem:[#allocation7 + $0x20] sm:$0xff]
        %v258 = vld [vmem:[#allocation7 + $0x28] sm:$0xff]
        %v259 = vld [vmem:[#allocation7 + $0x30] sm:$0xff]
        %v260 = vld [vmem:[#allocation7 + $0x38] sm:$0xff]
        %v261 = vld [vmem:[#allocation7 + $0x40] sm:$0xff]
        %v262 = vld [vmem:[#allocation7 + $0x48] sm:$0xff]
        %v263 = vld [vmem:[#allocation7 + $0x50] sm:$0xff]
        %v264 = vld [vmem:[#allocation7 + $0x58] sm:$0xff]
        %v265 = vld [vmem:[#allocation7 + $0x60] sm:$0xff]
        %v266 = vld [vmem:[#allocation7 + $0x68] sm:$0xff]
        %v267 = vld [vmem:[#allocation7 + $0x70] sm:$0xff]
        %v268 = vld [vmem:[#allocation7 + $0x78] sm:$0xff]
        %v269 = vld [vmem:[#allocation7 + $0x80] sm:$0xff]
        %v270 = vld [vmem:[#allocation7 + $0x88] sm:$0xff]
        %v271 = vld [vmem:[#allocation7 + $0x90] sm:$0xff]
        %v272 = vld [vmem:[#allocation7 + $0x98] sm:$0xff]
        %v273 = vld [vmem:[#allocation7 + $0xa0] sm:$0xff]
        %v274 = vld [vmem:[#allocation7 + $0xa8] sm:$0xff]
        %v275 = vld [vmem:[#allocation7 + $0xb0] sm:$0xff]
        %v276 = vld [vmem:[#allocation7 + $0xb8] sm:$0xff]
        %v277 = vld [vmem:[#allocation9] ss:$4 sm:$0x3]
        %v279 = vlaneseq
        %v280 = vshrl.u32 %v279, 7
        %v281 = vsub.s32 0, %v280
        %v282 = vrot.slane %v277, %v281
        %v283 = vlaneseq
        %v284 = vshrl.u32 %v283, 7
        %v285 = vsub.s32 1, %v284
        %v286 = vrot.slane %v277, %v285
        %vm289 = vcmask 785408
        %v291 = vsel %vm289, %v252, 0
        %293 = vmatprep.subr.mxu0 0.0
        %294 = vmatpush1.msra.mxu0 0.0
        %295 = vmatprep.subr.mxu0 0.0
        %296 = vmatpush1.msra.mxu0 0.0
        %297 = vmatprep.subr.mxu0 0.0
        %298 = vmatpush1.msra.mxu0 0.0
        %299 = vmatprep.subr.mxu0 0.0
        %300 = vmatpush1.msra.mxu0 0.0
        %301 = vmatprep.subr.mxu0 %v276
        %302 = vmatpush1.msra.mxu0 %v275
        %303 = vmatprep.subr.mxu0 %v274
        %304 = vmatpush1.msra.mxu0 %v273
        %305 = vmatprep.subr.mxu0 %v272
        %306 = vmatpush1.msra.mxu0 %v271
        %307 = vmatprep.subr.mxu0 %v270
        %308 = vmatpush1.msra.mxu0 %v269
        %309 = vmatprep.subr.mxu0 %v268
        %310 = vmatpush1.msra.mxu0 %v267
        %311 = vmatprep.subr.mxu0 %v266
        %312 = vmatpush1.msra.mxu0 %v265
        %313 = vmatprep.subr.mxu0 %v264
        %314 = vmatpush1.msra.mxu0 %v263
        %315 = vmatprep.subr.mxu0 %v262
        %316 = vmatpush1.msra.mxu0 %v261
        %317 = vmatprep.subr.mxu0 %v260
        %318 = vmatpush1.msra.mxu0 %v259
        %319 = vmatprep.subr.mxu0 %v258
        %320 = vmatpush1.msra.mxu0 %v257
        %321 = vmatprep.subr.mxu0 %v256
        %322 = vmatpush1.msra.mxu0 %v255
        %323 = vmatprep.subr.mxu0 %v254
        %324 = vmatpush1.msra.mxu0 %v253
        %325 = vmatprep.subr.mxu0 0.0
        %326 = vmatpush2.msra.mxu0 0.0
        %327 = vmatprep.subr.mxu0 0.0
        %328 = vmatpush2.msra.mxu0 0.0
        %329 = vmatprep.subr.mxu0 0.0
        %330 = vmatpush2.msra.mxu0 0.0
        %331 = vmatprep.subr.mxu0 0.0
        %332 = vmatpush2.msra.mxu0 0.0
        %333 = vmatprep.subr.mxu0 0.0
        %334 = vmatpush2.msra.mxu0 0.0
        %335 = vmatprep.subr.mxu0 0.0
        %336 = vmatpush2.msra.mxu0 0.0
        %337 = vmatprep.subr.mxu0 0.0
        %338 = vmatpush2.msra.mxu0 0.0
        %339 = vmatprep.subr.mxu0 0.0
        %340 = vmatpush2.msra.mxu0 0.0
        %341 = vmatprep.subr.mxu0 0.0
        %342 = vmatpush2.msra.mxu0 0.0
        %343 = vmatprep.subr.mxu0 0.0
        %344 = vmatpush2.msra.mxu0 0.0
        %345 = vmatprep.subr.mxu0 0.0
        %346 = vmatpush2.msra.mxu0 0.0
        %347 = vmatprep.subr.mxu0 0.0
        %348 = vmatpush2.msra.mxu0 0.0
        %349 = vmatprep.subr.mxu0 0.0
        %350 = vmatpush2.msra.mxu0 0.0
        %351 = vmatprep.subr.mxu0 0.0
        %352 = vmatpush2.msra.mxu0 0.0
        %353 = vmatprep.subr.mxu0 0.0
        %354 = vmatpush2.msra.mxu0 0.0
        %355 = vmatprep.subr.mxu0 0.0
        %356 = vmatpush2.msra.mxu0 0.0
        %357 = vmatprep.mubr.f32.mxu0 0.0
        %358 = vmatmul.mubr.f32.gmra.mxu0 %v291
        %v359 = vpop.f32.mrf.mxu0
        %v360 = vadd.f32 %v282, %v359
        %v361 = vpop.f32.mrf.mxu0
        %v362 = vadd.f32 %v286, %v361
        %363 = vdwg.mxu0
        %v364 = vmax.f32 %v360, 0.0
        %v365 = vmax.f32 %v362, 0.0
        %p366 = scmp.eq.s32.totalorder %s25, 0
        // Predicated region
        $region53: #{tpu_custom_call.1} parent=35 // pred_check
          %p367 = pneg %p366
        $region54: #{tpu_custom_call.1} parent=35 // pred_check_branch
          %369 = sbr.rel (%p367) target = $region56
        $region55: #{tpu_custom_call.1} parent=35 // pred_region
          %p370 = scmp.eq.s32.totalorder %s26, 0
          // Predicated region
          $region57: #{tpu_custom_call.1} parent=55 // pred_check
            %p371 = pneg %p370
          $region58: #{tpu_custom_call.1} parent=55 // pred_check_branch
            %373 = sbr.rel (%p371) target = $region60
          $region59: #{tpu_custom_call.1} parent=55 // pred_region
            %374 = vst [vmem:[#allocation2] sm:$0xf] 0.0
          $region60: #{tpu_custom_call.1} parent=55 // pred_fallthru
            _
          %v375 = vld [vmem:[#allocation2] ss:$2 sm:$0x3]
          %v376 = vadd.f32 %v364, 0.0
          %v377 = vadd.f32 %v365, 0.0
          %v380 = vcombine.low %v376, %v377
          %v382 = vunpack.c.l.s4 1966171168
          %v383 = vunpack.c.0.s8 %v382
          %v384 = vlaneseq
          %v385 = vshrl.u32 %v384, 7
          %v386 = vsub.s32 %v383, %v385
          %v387 = vrot.slane %v380, %v386
          %v389 = vunpack.c.l.s4 1966171168
          %v390 = vunpack.c.0.s8 %v389
          %v391 = vlaneseq
          %v392 = vshrl.u32 %v391, 7
          %v393 = vsub.s32 %v390, %v392
          %v394 = vrot.slane %v387, %v393
          %v396 = vadd.f32 %v375, %v394
          %v397 = vlaneseq
          %vm398 = vcmp.ge.s32.totalorder %v397, 0
          %vm399 = vcmp.lt.s32.totalorder %v397, 256
          %vm400 = vmand %vm398, %vm399
          %401 = vst.msk [vmem:[#allocation2] ss:$2 sm:$0x3] %vm400, %v396
          %s402 = scalar_lea.vmem [#allocation2], 1
          %v403 = vld [vmem:[%s402] ss:$2 sm:$0x3]
          %v404 = vmul.f32 %v364, %v364
          %v405 = vmul.f32 %v365, %v365
          %v406 = vadd.f32 %v404, 0.0
          %v407 = vadd.f32 %v405, 0.0
          %v410 = vcombine.low %v406, %v407
          %v412 = vunpack.c.l.s4 1966171168
          %v413 = vunpack.c.0.s8 %v412
          %v414 = vlaneseq
          %v415 = vshrl.u32 %v414, 7
          %v416 = vsub.s32 %v413, %v415
          %v417 = vrot.slane %v410, %v416
          %v419 = vunpack.c.l.s4 1966171168
          %v420 = vunpack.c.0.s8 %v419
          %v421 = vlaneseq
          %v422 = vshrl.u32 %v421, 7
          %v423 = vsub.s32 %v420, %v422
          %v424 = vrot.slane %v417, %v423
          %v426 = vadd.f32 %v403, %v424
          %427 = vst.msk [vmem:[%s402] ss:$2 sm:$0x3] %vm400, %v426
        $region56: #{tpu_custom_call.1} parent=35 // pred_fallthru
          _
        %p428 = scmp.eq.s32.totalorder %s25, 1
        // Predicated region
        $region61: #{tpu_custom_call.1} parent=35 // pred_check
          %p429 = pneg %p428
        $region62: #{tpu_custom_call.1} parent=35 // pred_check_branch
          %431 = sbr.rel (%p429) target = $region64
        $region63: #{tpu_custom_call.1} parent=35 // pred_region
          %p432 = scmp.eq.s32.totalorder %s26, 0
          // Predicated region
          $region65: #{tpu_custom_call.1} parent=63 // pred_check
            %p433 = pneg %p432
          $region66: #{tpu_custom_call.1} parent=63 // pred_check_branch
            %435 = sbr.rel (%p433) target = $region68
          $region67: #{tpu_custom_call.1} parent=63 // pred_region
            %v436 = vlaneseq
            %v437 = vshrl.u32 %v436, 7
            %v438 = vadd.s32 %v437, 8
            %v439 = vadd.s32 %v437, 16
            %v440 = vadd.s32 %v437, 24
            %v441 = vadd.s32 %v437, 32
            %v442 = vadd.s32 %v437, 40
            %v443 = vadd.s32 %v437, 48
            %v444 = vadd.s32 %v437, 56
            %v445 = vadd.s32 %v437, 64
            %v446 = vadd.s32 %v437, 72
            %v447 = vadd.s32 %v437, 80
            %v448 = vadd.s32 %v437, 88
            %v449 = vadd.s32 %v437, 96
            %v450 = vadd.s32 %v437, 104
            %v451 = vadd.s32 %v437, 112
            %v452 = vadd.s32 %v437, 120
            %v453 = vadd.s32 %v437, 128
            %v454 = vadd.s32 %v437, 136
            %v455 = vadd.s32 %v437, 144
            %v456 = vadd.s32 %v437, 152
            %v457 = vadd.s32 %v437, 160
            %v458 = vadd.s32 %v437, 168
            %v459 = vadd.s32 %v437, 176
            %v460 = vadd.s32 %v437, 184
            %v461 = vadd.s32 %v437, 192
            %v462 = vadd.s32 %v437, 200
            %v463 = vadd.s32 %v437, 208
            %v464 = vadd.s32 %v437, 216
            %v465 = vadd.s32 %v437, 224
            %v466 = vadd.s32 %v437, 232
            %v467 = vadd.s32 %v437, 240
            %v468 = vadd.s32 %v437, 248
            %v469 = vlaneseq
            %v470 = vand.u32 %v469, 127
            %vm471 = vcmp.lt.s32.totalorder %v437, 0
            %v472 = vsub.s32 0, %v437
            %v473 = vsel %vm471, %v472, %v437
            %v474 = vshrl.u32 %v473, 5
            %v475 = vand.u32 %v473, 31
            %v476 = vsub.s32 0, %v475
            %v477 = vsel %vm471, %v476, %v475
            %vm478 = vcmp.lt.s32.totalorder %v438, 0
            %v479 = vsub.s32 0, %v438
            %v480 = vsel %vm478, %v479, %v438
            %v481 = vshrl.u32 %v480, 5
            %v482 = vand.u32 %v480, 31
            %v483 = vsub.s32 0, %v482
            %v484 = vsel %vm478, %v483, %v482
            %vm485 = vcmp.lt.s32.totalorder %v439, 0
            %v486 = vsub.s32 0, %v439
            %v487 = vsel %vm485, %v486, %v439
            %v488 = vshrl.u32 %v487, 5
            %v489 = vand.u32 %v487, 31
            %v490 = vsub.s32 0, %v489
            %v491 = vsel %vm485, %v490, %v489
            %vm492 = vcmp.lt.s32.totalorder %v440, 0
            %v493 = vsub.s32 0, %v440
            %v494 = vsel %vm492, %v493, %v440
            %v495 = vshrl.u32 %v494, 5
            %v496 = vand.u32 %v494, 31
            %v497 = vsub.s32 0, %v496
            %v498 = vsel %vm492, %v497, %v496
            %vm499 = vcmp.lt.s32.totalorder %v441, 0
            %v500 = vsub.s32 0, %v441
            %v501 = vsel %vm499, %v500, %v441
            %v502 = vshrl.u32 %v501, 5
            %v503 = vand.u32 %v501, 31
            %v504 = vsub.s32 0, %v503
            %v505 = vsel %vm499, %v504, %v503
            %vm506 = vcmp.lt.s32.totalorder %v442, 0
            %v507 = vsub.s32 0, %v442
            %v508 = vsel %vm506, %v507, %v442
            %v509 = vshrl.u32 %v508, 5
            %v510 = vand.u32 %v508, 31
            %v511 = vsub.s32 0, %v510
            %v512 = vsel %vm506, %v511, %v510
            %vm513 = vcmp.lt.s32.totalorder %v443, 0
            %v514 = vsub.s32 0, %v443
            %v515 = vsel %vm513, %v514, %v443
            %v516 = vshrl.u32 %v515, 5
            %v517 = vand.u32 %v515, 31
            %v518 = vsub.s32 0, %v517
            %v519 = vsel %vm513, %v518, %v517
            %vm520 = vcmp.lt.s32.totalorder %v444, 0
            %v521 = vsub.s32 0, %v444
            %v522 = vsel %vm520, %v521, %v444
            %v523 = vshrl.u32 %v522, 5
            %v524 = vand.u32 %v522, 31
            %v525 = vsub.s32 0, %v524
            %v526 = vsel %vm520, %v525, %v524
            %vm527 = vcmp.lt.s32.totalorder %v445, 0
            %v528 = vsub.s32 0, %v445
            %v529 = vsel %vm527, %v528, %v445
            %v530 = vshrl.u32 %v529, 5
            %v531 = vand.u32 %v529, 31
            %v532 = vsub.s32 0, %v531
            %v533 = vsel %vm527, %v532, %v531
            %vm534 = vcmp.lt.s32.totalorder %v446, 0
            %v535 = vsub.s32 0, %v446
            %v536 = vsel %vm534, %v535, %v446
            %v537 = vshrl.u32 %v536, 5
            %v538 = vand.u32 %v536, 31
            %v539 = vsub.s32 0, %v538
            %v540 = vsel %vm534, %v539, %v538
            %vm541 = vcmp.lt.s32.totalorder %v447, 0
            %v542 = vsub.s32 0, %v447
            %v543 = vsel %vm541, %v542, %v447
            %v544 = vshrl.u32 %v543, 5
            %v545 = vand.u32 %v543, 31
            %v546 = vsub.s32 0, %v545
            %v547 = vsel %vm541, %v546, %v545
            %vm548 = vcmp.lt.s32.totalorder %v448, 0
            %v549 = vsub.s32 0, %v448
            %v550 = vsel %vm548, %v549, %v448
            %v551 = vshrl.u32 %v550, 5
            %v552 = vand.u32 %v550, 31
            %v553 = vsub.s32 0, %v552
            %v554 = vsel %vm548, %v553, %v552
            %vm555 = vcmp.lt.s32.totalorder %v449, 0
            %v556 = vsub.s32 0, %v449
            %v557 = vsel %vm555, %v556, %v449
            %v558 = vshrl.u32 %v557, 5
            %v559 = vand.u32 %v557, 31
            %v560 = vsub.s32 0, %v559
            %v561 = vsel %vm555, %v560, %v559
            %vm562 = vcmp.lt.s32.totalorder %v450, 0
            %v563 = vsub.s32 0, %v450
            %v564 = vsel %vm562, %v563, %v450
            %v565 = vshrl.u32 %v564, 5
            %v566 = vand.u32 %v564, 31
            %v567 = vsub.s32 0, %v566
            %v568 = vsel %vm562, %v567, %v566
            %vm569 = vcmp.lt.s32.totalorder %v451, 0
            %v570 = vsub.s32 0, %v451
            %v571 = vsel %vm569, %v570, %v451
            %v572 = vshrl.u32 %v571, 5
            %v573 = vand.u32 %v571, 31
            %v574 = vsub.s32 0, %v573
            %v575 = vsel %vm569, %v574, %v573
            %vm576 = vcmp.lt.s32.totalorder %v452, 0
            %v577 = vsub.s32 0, %v452
            %v578 = vsel %vm576, %v577, %v452
            %v579 = vshrl.u32 %v578, 5
            %v580 = vand.u32 %v578, 31
            %v581 = vsub.s32 0, %v580
            %v582 = vsel %vm576, %v581, %v580
            %vm583 = vcmp.lt.s32.totalorder %v453, 0
            %v584 = vsub.s32 0, %v453
            %v585 = vsel %vm583, %v584, %v453
            %v586 = vshrl.u32 %v585, 5
            %v587 = vand.u32 %v585, 31
            %v588 = vsub.s32 0, %v587
            %v589 = vsel %vm583, %v588, %v587
            %vm590 = vcmp.lt.s32.totalorder %v454, 0
            %v591 = vsub.s32 0, %v454
            %v592 = vsel %vm590, %v591, %v454
            %v593 = vshrl.u32 %v592, 5
            %v594 = vand.u32 %v592, 31
            %v595 = vsub.s32 0, %v594
            %v596 = vsel %vm590, %v595, %v594
            %vm597 = vcmp.lt.s32.totalorder %v455, 0
            %v598 = vsub.s32 0, %v455
            %v599 = vsel %vm597, %v598, %v455
            %v600 = vshrl.u32 %v599, 5
            %v601 = vand.u32 %v599, 31
            %v602 = vsub.s32 0, %v601
            %v603 = vsel %vm597, %v602, %v601
            %vm604 = vcmp.lt.s32.totalorder %v456, 0
            %v605 = vsub.s32 0, %v456
            %v606 = vsel %vm604, %v605, %v456
            %v607 = vshrl.u32 %v606, 5
            %v608 = vand.u32 %v606, 31
            %v609 = vsub.s32 0, %v608
            %v610 = vsel %vm604, %v609, %v608
            %vm611 = vcmp.lt.s32.totalorder %v457, 0
            %v612 = vsub.s32 0, %v457
            %v613 = vsel %vm611, %v612, %v457
            %v614 = vshrl.u32 %v613, 5
            %v615 = vand.u32 %v613, 31
            %v616 = vsub.s32 0, %v615
            %v617 = vsel %vm611, %v616, %v615
            %vm618 = vcmp.lt.s32.totalorder %v458, 0
            %v619 = vsub.s32 0, %v458
            %v620 = vsel %vm618, %v619, %v458
            %v621 = vshrl.u32 %v620, 5
            %v622 = vand.u32 %v620, 31
            %v623 = vsub.s32 0, %v622
            %v624 = vsel %vm618, %v623, %v622
            %vm625 = vcmp.lt.s32.totalorder %v459, 0
            %v626 = vsub.s32 0, %v459
            %v627 = vsel %vm625, %v626, %v459
            %v628 = vshrl.u32 %v627, 5
            %v629 = vand.u32 %v627, 31
            %v630 = vsub.s32 0, %v629
            %v631 = vsel %vm625, %v630, %v629
            %vm632 = vcmp.lt.s32.totalorder %v460, 0
            %v633 = vsub.s32 0, %v460
            %v634 = vsel %vm632, %v633, %v460
            %v635 = vshrl.u32 %v634, 5
            %v636 = vand.u32 %v634, 31
            %v637 = vsub.s32 0, %v636
            %v638 = vsel %vm632, %v637, %v636
            %vm639 = vcmp.lt.s32.totalorder %v461, 0
            %v640 = vsub.s32 0, %v461
            %v641 = vsel %vm639, %v640, %v461
            %v642 = vshrl.u32 %v641, 5
            %v643 = vand.u32 %v641, 31
            %v644 = vsub.s32 0, %v643
            %v645 = vsel %vm639, %v644, %v643
            %vm646 = vcmp.lt.s32.totalorder %v462, 0
            %v647 = vsub.s32 0, %v462
            %v648 = vsel %vm646, %v647, %v462
            %v649 = vshrl.u32 %v648, 5
            %v650 = vand.u32 %v648, 31
            %v651 = vsub.s32 0, %v650
            %v652 = vsel %vm646, %v651, %v650
            %vm653 = vcmp.lt.s32.totalorder %v463, 0
            %v654 = vsub.s32 0, %v463
            %v655 = vsel %vm653, %v654, %v463
            %v656 = vshrl.u32 %v655, 5
            %v657 = vand.u32 %v655, 31
            %v658 = vsub.s32 0, %v657
            %v659 = vsel %vm653, %v658, %v657
            %vm660 = vcmp.lt.s32.totalorder %v464, 0
            %v661 = vsub.s32 0, %v464
            %v662 = vsel %vm660, %v661, %v464
            %v663 = vshrl.u32 %v662, 5
            %v664 = vand.u32 %v662, 31
            %v665 = vsub.s32 0, %v664
            %v666 = vsel %vm660, %v665, %v664
            %vm667 = vcmp.lt.s32.totalorder %v465, 0
            %v668 = vsub.s32 0, %v465
            %v669 = vsel %vm667, %v668, %v465
            %v670 = vshrl.u32 %v669, 5
            %v671 = vand.u32 %v669, 31
            %v672 = vsub.s32 0, %v671
            %v673 = vsel %vm667, %v672, %v671
            %vm674 = vcmp.lt.s32.totalorder %v466, 0
            %v675 = vsub.s32 0, %v466
            %v676 = vsel %vm674, %v675, %v466
            %v677 = vshrl.u32 %v676, 5
            %v678 = vand.u32 %v676, 31
            %v679 = vsub.s32 0, %v678
            %v680 = vsel %vm674, %v679, %v678
            %vm681 = vcmp.lt.s32.totalorder %v467, 0
            %v682 = vsub.s32 0, %v467
            %v683 = vsel %vm681, %v682, %v467
            %v684 = vshrl.u32 %v683, 5
            %v685 = vand.u32 %v683, 31
            %v686 = vsub.s32 0, %v685
            %v687 = vsel %vm681, %v686, %v685
            %vm688 = vcmp.lt.s32.totalorder %v468, 0
            %v689 = vsub.s32 0, %v468
            %v690 = vsel %vm688, %v689, %v468
            %v691 = vshrl.u32 %v690, 5
            %v692 = vand.u32 %v690, 31
            %v693 = vsub.s32 0, %v692
            %v694 = vsel %vm688, %v693, %v692
            %vm695 = vcmp.ne.s32.totalorder %v477, 0
            %vm696 = vcmp.ne.s32.totalorder %v484, 0
            %vm697 = vcmp.ne.s32.totalorder %v491, 0
            %vm698 = vcmp.ne.s32.totalorder %v498, 0
            %vm699 = vcmp.ne.s32.totalorder %v505, 0
            %vm700 = vcmp.ne.s32.totalorder %v512, 0
            %vm701 = vcmp.ne.s32.totalorder %v519, 0
            %vm702 = vcmp.ne.s32.totalorder %v526, 0
            %vm703 = vcmp.ne.s32.totalorder %v533, 0
            %vm704 = vcmp.ne.s32.totalorder %v540, 0
            %vm705 = vcmp.ne.s32.totalorder %v547, 0
            %vm706 = vcmp.ne.s32.totalorder %v554, 0
            %vm707 = vcmp.ne.s32.totalorder %v561, 0
            %vm708 = vcmp.ne.s32.totalorder %v568, 0
            %vm709 = vcmp.ne.s32.totalorder %v575, 0
            %vm710 = vcmp.ne.s32.totalorder %v582, 0
            %vm711 = vcmp.ne.s32.totalorder %v589, 0
            %vm712 = vcmp.ne.s32.totalorder %v596, 0
            %vm713 = vcmp.ne.s32.totalorder %v603, 0
            %vm714 = vcmp.ne.s32.totalorder %v610, 0
            %vm715 = vcmp.ne.s32.totalorder %v617, 0
            %vm716 = vcmp.ne.s32.totalorder %v624, 0
            %vm717 = vcmp.ne.s32.totalorder %v631, 0
            %vm718 = vcmp.ne.s32.totalorder %v638, 0
            %vm719 = vcmp.ne.s32.totalorder %v645, 0
            %vm720 = vcmp.ne.s32.totalorder %v652, 0
            %vm721 = vcmp.ne.s32.totalorder %v659, 0
            %vm722 = vcmp.ne.s32.totalorder %v666, 0
            %vm723 = vcmp.ne.s32.totalorder %v673, 0
            %vm724 = vcmp.ne.s32.totalorder %v680, 0
            %vm725 = vcmp.ne.s32.totalorder %v687, 0
            %vm726 = vcmp.ne.s32.totalorder %v694, 0
            %vm727 = vcmp.lt.s32.totalorder %v477, 0
            %vm728 = vcmp.lt.s32.totalorder %v484, 0
            %vm729 = vcmp.lt.s32.totalorder %v491, 0
            %vm730 = vcmp.lt.s32.totalorder %v498, 0
            %vm731 = vcmp.lt.s32.totalorder %v505, 0
            %vm732 = vcmp.lt.s32.totalorder %v512, 0
            %vm733 = vcmp.lt.s32.totalorder %v519, 0
            %vm734 = vcmp.lt.s32.totalorder %v526, 0
            %vm735 = vcmp.lt.s32.totalorder %v533, 0
            %vm736 = vcmp.lt.s32.totalorder %v540, 0
            %vm737 = vcmp.lt.s32.totalorder %v547, 0
            %vm738 = vcmp.lt.s32.totalorder %v554, 0
            %vm739 = vcmp.lt.s32.totalorder %v561, 0
            %vm740 = vcmp.lt.s32.totalorder %v568, 0
            %vm741 = vcmp.lt.s32.totalorder %v575, 0
            %vm742 = vcmp.lt.s32.totalorder %v582, 0
            %vm743 = vcmp.lt.s32.totalorder %v589, 0
            %vm744 = vcmp.lt.s32.totalorder %v596, 0
            %vm745 = vcmp.lt.s32.totalorder %v603, 0
            %vm746 = vcmp.lt.s32.totalorder %v610, 0
            %vm747 = vcmp.lt.s32.totalorder %v617, 0
            %vm748 = vcmp.lt.s32.totalorder %v624, 0
            %vm749 = vcmp.lt.s32.totalorder %v631, 0
            %vm750 = vcmp.lt.s32.totalorder %v638, 0
            %vm751 = vcmp.lt.s32.totalorder %v645, 0
            %vm752 = vcmp.lt.s32.totalorder %v652, 0
            %vm753 = vcmp.lt.s32.totalorder %v659, 0
            %vm754 = vcmp.lt.s32.totalorder %v666, 0
            %vm755 = vcmp.lt.s32.totalorder %v673, 0
            %vm756 = vcmp.lt.s32.totalorder %v680, 0
            %vm757 = vcmp.lt.s32.totalorder %v687, 0
            %vm758 = vcmp.lt.s32.totalorder %v694, 0
            %vm759 = vmand %vm727, %vm695
            %vm760 = vmand %vm728, %vm696
            %vm761 = vmand %vm729, %vm697
            %vm762 = vmand %vm730, %vm698
            %vm763 = vmand %vm731, %vm699
            %vm764 = vmand %vm732, %vm700
            %vm765 = vmand %vm733, %vm701
            %vm766 = vmand %vm734, %vm702
            %vm767 = vmand %vm735, %vm703
            %vm768 = vmand %vm736, %vm704
            %vm769 = vmand %vm737, %vm705
            %vm770 = vmand %vm738, %vm706
            %vm771 = vmand %vm739, %vm707
            %vm772 = vmand %vm740, %vm708
            %vm773 = vmand %vm741, %vm709
            %vm774 = vmand %vm742, %vm710
            %vm775 = vmand %vm743, %vm711
            %vm776 = vmand %vm744, %vm712
            %vm777 = vmand %vm745, %vm713
            %vm778 = vmand %vm746, %vm714
            %vm779 = vmand %vm747, %vm715
            %vm780 = vmand %vm748, %vm716
            %vm781 = vmand %vm749, %vm717
            %vm782 = vmand %vm750, %vm718
            %vm783 = vmand %vm751, %vm719
            %vm784 = vmand %vm752, %vm720
            %vm785 = vmand %vm753, %vm721
            %vm786 = vmand %vm754, %vm722
            %vm787 = vmand %vm755, %vm723
            %vm788 = vmand %vm756, %vm724
            %vm789 = vmand %vm757, %vm725
            %vm790 = vmand %vm758, %vm726
            %v791 = vadd.s32 %v477, 32
            %v792 = vadd.s32 %v484, 32
            %v793 = vadd.s32 %v491, 32
            %v794 = vadd.s32 %v498, 32
            %v795 = vadd.s32 %v505, 32
            %v796 = vadd.s32 %v512, 32
            %v797 = vadd.s32 %v519, 32
            %v798 = vadd.s32 %v526, 32
            %v799 = vadd.s32 %v533, 32
            %v800 = vadd.s32 %v540, 32
            %v801 = vadd.s32 %v547, 32
            %v802 = vadd.s32 %v554, 32
            %v803 = vadd.s32 %v561, 32
            %v804 = vadd.s32 %v568, 32
            %v805 = vadd.s32 %v575, 32
            %v806 = vadd.s32 %v582, 32
            %v807 = vadd.s32 %v589, 32
            %v808 = vadd.s32 %v596, 32
            %v809 = vadd.s32 %v603, 32
            %v810 = vadd.s32 %v610, 32
            %v811 = vadd.s32 %v617, 32
            %v812 = vadd.s32 %v624, 32
            %v813 = vadd.s32 %v631, 32
            %v814 = vadd.s32 %v638, 32
            %v815 = vadd.s32 %v645, 32
            %v816 = vadd.s32 %v652, 32
            %v817 = vadd.s32 %v659, 32
            %v818 = vadd.s32 %v666, 32
            %v819 = vadd.s32 %v673, 32
            %v820 = vadd.s32 %v680, 32
            %v821 = vadd.s32 %v687, 32
            %v822 = vadd.s32 %v694, 32
            %v823 = vsel %vm759, %v791, %v477
            %v824 = vsel %vm760, %v792, %v484
            %v825 = vsel %vm761, %v793, %v491
            %v826 = vsel %vm762, %v794, %v498
            %v827 = vsel %vm763, %v795, %v505
            %v828 = vsel %vm764, %v796, %v512
            %v829 = vsel %vm765, %v797, %v519
            %v830 = vsel %vm766, %v798, %v526
            %v831 = vsel %vm767, %v799, %v533
            %v832 = vsel %vm768, %v800, %v540
            %v833 = vsel %vm769, %v801, %v547
            %v834 = vsel %vm770, %v802, %v554
            %v835 = vsel %vm771, %v803, %v561
            %v836 = vsel %vm772, %v804, %v568
            %v837 = vsel %vm773, %v805, %v575
            %v838 = vsel %vm774, %v806, %v582
            %v839 = vsel %vm775, %v807, %v589
            %v840 = vsel %vm776, %v808, %v596
            %v841 = vsel %vm777, %v809, %v603
            %v842 = vsel %vm778, %v810, %v610
            %v843 = vsel %vm779, %v811, %v617
            %v844 = vsel %vm780, %v812, %v624
            %v845 = vsel %vm781, %v813, %v631
            %v846 = vsel %vm782, %v814, %v638
            %v847 = vsel %vm783, %v815, %v645
            %v848 = vsel %vm784, %v816, %v652
            %v849 = vsel %vm785, %v817, %v659
            %v850 = vsel %vm786, %v818, %v666
            %v851 = vsel %vm787, %v819, %v673
            %v852 = vsel %vm788, %v820, %v680
            %v853 = vsel %vm789, %v821, %v687
            %v854 = vsel %vm790, %v822, %v694
            %vm855 = vcmp.eq.s32.totalorder %v823, %v470
            %vm856 = vcmp.eq.s32.totalorder %v824, %v470
            %vm857 = vcmp.eq.s32.totalorder %v825, %v470
            %vm858 = vcmp.eq.s32.totalorder %v826, %v470
            %vm859 = vcmp.eq.s32.totalorder %v827, %v470
            %vm860 = vcmp.eq.s32.totalorder %v828, %v470
            %vm861 = vcmp.eq.s32.totalorder %v829, %v470
            %vm862 = vcmp.eq.s32.totalorder %v830, %v470
            %vm863 = vcmp.eq.s32.totalorder %v831, %v470
            %vm864 = vcmp.eq.s32.totalorder %v832, %v470
            %vm865 = vcmp.eq.s32.totalorder %v833, %v470
            %vm866 = vcmp.eq.s32.totalorder %v834, %v470
            %vm867 = vcmp.eq.s32.totalorder %v835, %v470
            %vm868 = vcmp.eq.s32.totalorder %v836, %v470
            %vm869 = vcmp.eq.s32.totalorder %v837, %v470
            %vm870 = vcmp.eq.s32.totalorder %v838, %v470
            %vm871 = vcmp.eq.s32.totalorder %v839, %v470
            %vm872 = vcmp.eq.s32.totalorder %v840, %v470
            %vm873 = vcmp.eq.s32.totalorder %v841, %v470
            %vm874 = vcmp.eq.s32.totalorder %v842, %v470
            %vm875 = vcmp.eq.s32.totalorder %v843, %v470
            %vm876 = vcmp.eq.s32.totalorder %v844, %v470
            %vm877 = vcmp.eq.s32.totalorder %v845, %v470
            %vm878 = vcmp.eq.s32.totalorder %v846, %v470
            %vm879 = vcmp.eq.s32.totalorder %v847, %v470
            %vm880 = vcmp.eq.s32.totalorder %v848, %v470
            %vm881 = vcmp.eq.s32.totalorder %v849, %v470
            %vm882 = vcmp.eq.s32.totalorder %v850, %v470
            %vm883 = vcmp.eq.s32.totalorder %v851, %v470
            %vm884 = vcmp.eq.s32.totalorder %v852, %v470
            %vm885 = vcmp.eq.s32.totalorder %v853, %v470
            %vm886 = vcmp.eq.s32.totalorder %v854, %v470
            %v887 = vsel %vm855, 1.0, 0.0
            %v888 = vsel %vm856, 1.0, 0.0
            %v889 = vsel %vm857, 1.0, 0.0
            %v890 = vsel %vm858, 1.0, 0.0
            %v891 = vsel %vm859, 1.0, 0.0
            %v892 = vsel %vm860, 1.0, 0.0
            %v893 = vsel %vm861, 1.0, 0.0
            %v894 = vsel %vm862, 1.0, 0.0
            %v895 = vsel %vm863, 1.0, 0.0
            %v896 = vsel %vm864, 1.0, 0.0
            %v897 = vsel %vm865, 1.0, 0.0
            %v898 = vsel %vm866, 1.0, 0.0
            %v899 = vsel %vm867, 1.0, 0.0
            %v900 = vsel %vm868, 1.0, 0.0
            %v901 = vsel %vm869, 1.0, 0.0
            %v902 = vsel %vm870, 1.0, 0.0
            %v903 = vsel %vm871, 1.0, 0.0
            %v904 = vsel %vm872, 1.0, 0.0
            %v905 = vsel %vm873, 1.0, 0.0
            %v906 = vsel %vm874, 1.0, 0.0
            %v907 = vsel %vm875, 1.0, 0.0
            %v908 = vsel %vm876, 1.0, 0.0
            %v909 = vsel %vm877, 1.0, 0.0
            %v910 = vsel %vm878, 1.0, 0.0
            %v911 = vsel %vm879, 1.0, 0.0
            %v912 = vsel %vm880, 1.0, 0.0
            %v913 = vsel %vm881, 1.0, 0.0
            %v914 = vsel %vm882, 1.0, 0.0
            %v915 = vsel %vm883, 1.0, 0.0
            %v916 = vsel %vm884, 1.0, 0.0
            %v917 = vsel %vm885, 1.0, 0.0
            %v918 = vsel %vm886, 1.0, 0.0
            %v919 = vld [vmem:[#allocation2] sm:$0xf]
            %v922 = vunpack.c.l.s4 1983009808
            %v923 = vunpack.c.0.s8 %v922
            %v924 = vlaneseq
            %v925 = vshrl.u32 %v924, 7
            %v926 = vsub.s32 %v923, %v925
            %v927 = vrot.slane %v919, %v926
            %v928 = vcombine.high %v927, %v927
            %931 = vmatprep.subr.mxu0 0.0
            %932 = vmatpush1.msra.mxu0 %v902
            %933 = vmatprep.subr.mxu0 0.0
            %934 = vmatpush1.msra.mxu0 %v901
            %935 = vmatprep.subr.mxu0 0.0
            %936 = vmatpush1.msra.mxu0 %v900
            %937 = vmatprep.subr.mxu0 0.0
            %938 = vmatpush1.msra.mxu0 %v899
            %939 = vmatprep.subr.mxu0 0.0
            %940 = vmatpush1.msra.mxu0 %v898
            %941 = vmatprep.subr.mxu0 0.0
            %942 = vmatpush1.msra.mxu0 %v897
            %943 = vmatprep.subr.mxu0 0.0
            %944 = vmatpush1.msra.mxu0 %v896
            %945 = vmatprep.subr.mxu0 0.0
            %946 = vmatpush1.msra.mxu0 %v895
            %947 = vmatprep.subr.mxu0 0.0
            %948 = vmatpush1.msra.mxu0 %v894
            %949 = vmatprep.subr.mxu0 0.0
            %950 = vmatpush1.msra.mxu0 %v893
            %951 = vmatprep.subr.mxu0 0.0
            %952 = vmatpush1.msra.mxu0 %v892
            %953 = vmatprep.subr.mxu0 0.0
            %954 = vmatpush1.msra.mxu0 %v891
            %955 = vmatprep.subr.mxu0 0.0
            %956 = vmatpush1.msra.mxu0 %v890
            %957 = vmatprep.subr.mxu0 0.0
            %958 = vmatpush1.msra.mxu0 %v889
            %959 = vmatprep.subr.mxu0 0.0
            %960 = vmatpush1.msra.mxu0 %v888
            %961 = vmatprep.subr.mxu0 0.0
            %962 = vmatpush1.msra.mxu0 %v887
            %963 = vmatprep.subr.mxu0 0.0
            %964 = vmatpush2.msra.mxu0 %v918
            %965 = vmatprep.subr.mxu0 0.0
            %966 = vmatpush2.msra.mxu0 %v917
            %967 = vmatprep.subr.mxu0 0.0
            %968 = vmatpush2.msra.mxu0 %v916
            %969 = vmatprep.subr.mxu0 0.0
            %970 = vmatpush2.msra.mxu0 %v915
            %971 = vmatprep.subr.mxu0 0.0
            %972 = vmatpush2.msra.mxu0 %v914
            %973 = vmatprep.subr.mxu0 0.0
            %974 = vmatpush2.msra.mxu0 %v913
            %975 = vmatprep.subr.mxu0 0.0
            %976 = vmatpush2.msra.mxu0 %v912
            %977 = vmatprep.subr.mxu0 0.0
            %978 = vmatpush2.msra.mxu0 %v911
            %979 = vmatprep.subr.mxu0 0.0
            %980 = vmatpush2.msra.mxu0 %v910
            %981 = vmatprep.subr.mxu0 0.0
            %982 = vmatpush2.msra.mxu0 %v909
            %983 = vmatprep.subr.mxu0 0.0
            %984 = vmatpush2.msra.mxu0 %v908
            %985 = vmatprep.subr.mxu0 0.0
            %986 = vmatpush2.msra.mxu0 %v907
            %987 = vmatprep.subr.mxu0 0.0
            %988 = vmatpush2.msra.mxu0 %v906
            %989 = vmatprep.subr.mxu0 0.0
            %990 = vmatpush2.msra.mxu0 %v905
            %991 = vmatprep.subr.mxu0 0.0
            %992 = vmatpush2.msra.mxu0 %v904
            %993 = vmatprep.subr.mxu0 0.0
            %994 = vmatpush2.msra.mxu0 %v903
            %995 = vmatprep.mubr.f32.mxu0 %v928
            %996 = vmatmul.mubr.f32.gmra.mxu0 %v927
            %v997 = vpop.f32.mrf.mxu0
            %v998 = vadd.f32 0.0, %v997
            %v999 = vpop.f32.mrf.mxu0
            %1000 = vdwg.mxu0
            %v1001 = vmul.f32 %v998, 0.125
            %v1002 = vmul.f32 %v1001, %v1001
            %v1004 = vrot.slane %v1002, 7
            %v1006 = vsub.f32 %v1001, %v1004
            %v1007 = vld [vmem:[#allocation9 + $0x1] sm:$0x1]
            %v1008 = vadd.f32 %v1006, 1e-05
            %v1009 = vrsqrt.pop %v1008
            %v1011 = vrot.slane %v1009, 5
            %v1012 = vrot.slane %v1011, 4
            %v1014 = vmul.f32 %v1007, %v1012
            %v1015 = vld [vmem:[#allocation9 + $0x2] sm:$0x1]
            %v1016 = vmul.f32 %v1001, %v1014
            %v1017 = vsub.f32 %v1015, %v1016
            %v1018 = vadd.s32 %v470, 128
            %vm1019 = vcmp.lt.s32.totalorder %v470, 0
            %v1020 = vsub.s32 0, %v470
            %v1021 = vsel %vm1019, %v1020, %v470
            %v1022 = vshrl.u32 %v1021, 5
            %v1023 = vand.u32 %v1021, 31
            %v1024 = vsub.s32 0, %v1023
            %v1025 = vsel %vm1019, %v1024, %v1023
            %vm1026 = vcmp.lt.s32.totalorder %v1018, 0
            %v1027 = vsub.s32 0, %v1018
            %v1028 = vsel %vm1026, %v1027, %v1018
            %v1029 = vshrl.u32 %v1028, 5
            %v1030 = vand.u32 %v1028, 31
            %v1031 = vsub.s32 0, %v1030
            %v1032 = vsel %vm1026, %v1031, %v1030
            %vm1033 = vcmp.ne.s32.totalorder %v1025, 0
            %vm1034 = vcmp.ne.s32.totalorder %v1032, 0
            %vm1035 = vcmp.lt.s32.totalorder %v1025, 0
            %vm1036 = vcmp.lt.s32.totalorder %v1032, 0
            %vm1037 = vmand %vm1035, %vm1033
            %vm1038 = vmand %vm1036, %vm1034
            %v1039 = vadd.s32 %v1025, 32
            %v1040 = vadd.s32 %v1032, 32
            %v1041 = vsel %vm1037, %v1039, %v1025
            %v1042 = vsel %vm1038, %v1040, %v1032
            %vm1043 = vcmp.eq.s32.totalorder %v1041, %v437
            %vm1044 = vcmp.eq.s32.totalorder %v1042, %v437
            %vm1045 = vcmp.eq.s32.totalorder %v1041, %v438
            %vm1046 = vcmp.eq.s32.totalorder %v1042, %v438
            %vm1047 = vcmp.eq.s32.totalorder %v1041, %v439
            %vm1048 = vcmp.eq.s32.totalorder %v1042, %v439
            %vm1049 = vcmp.eq.s32.totalorder %v1041, %v440
            %vm1050 = vcmp.eq.s32.totalorder %v1042, %v440
            %v1051 = vsel %vm1043, 1.0, 0.0
            %v1052 = vsel %vm1044, 1.0, 0.0
            %v1053 = vsel %vm1045, 1.0, 0.0
            %v1054 = vsel %vm1046, 1.0, 0.0
            %v1055 = vsel %vm1047, 1.0, 0.0
            %v1056 = vsel %vm1048, 1.0, 0.0
            %v1057 = vsel %vm1049, 1.0, 0.0
            %v1058 = vsel %vm1050, 1.0, 0.0
            %v1060 = vlaneseq
            %v1061 = vshrl.u32 %v1060, 7
            %v1062 = vsub.s32 0, %v1061
            %v1063 = vrot.slane %v1017, %v1062
            %vm1065 = vcmask 1040384
            %v1066 = vsel %vm1065, %v1014, %v1063
            %vm1067 = vcmask 261120
            %v1069 = vsel %vm1067, %v1066, 0
            %1071 = vmatprep.subr.mxu0 0.0
            %1072 = vmatpush1.msra.mxu0 0.0
            %1073 = vmatprep.subr.mxu0 0.0
            %1074 = vmatpush1.msra.mxu0 0.0
            %1075 = vmatprep.subr.mxu0 0.0
            %1076 = vmatpush1.msra.mxu0 0.0
            %1077 = vmatprep.subr.mxu0 0.0
            %1078 = vmatpush1.msra.mxu0 0.0
            %1079 = vmatprep.subr.mxu0 0.0
            %1080 = vmatpush1.msra.mxu0 0.0
            %1081 = vmatprep.subr.mxu0 0.0
            %1082 = vmatpush1.msra.mxu0 0.0
            %1083 = vmatprep.subr.mxu0 0.0
            %1084 = vmatpush1.msra.mxu0 0.0
            %1085 = vmatprep.subr.mxu0 0.0
            %1086 = vmatpush1.msra.mxu0 0.0
            %1087 = vmatprep.subr.mxu0 0.0
            %1088 = vmatpush1.msra.mxu0 0.0
            %1089 = vmatprep.subr.mxu0 0.0
            %1090 = vmatpush1.msra.mxu0 0.0
            %1091 = vmatprep.subr.mxu0 0.0
            %1092 = vmatpush1.msra.mxu0 0.0
            %1093 = vmatprep.subr.mxu0 0.0
            %1094 = vmatpush1.msra.mxu0 0.0
            %1095 = vmatprep.subr.mxu0 %v1058
            %1096 = vmatpush1.msra.mxu0 %v1057
            %1097 = vmatprep.subr.mxu0 %v1056
            %1098 = vmatpush1.msra.mxu0 %v1055
            %1099 = vmatprep.subr.mxu0 %v1054
            %1100 = vmatpush1.msra.mxu0 %v1053
            %1101 = vmatprep.subr.mxu0 %v1052
            %1102 = vmatpush1.msra.mxu0 %v1051
            %1103 = vmatprep.subr.mxu0 0.0
            %1104 = vmatpush2.msra.mxu0 0.0
            %1105 = vmatprep.subr.mxu0 0.0
            %1106 = vmatpush2.msra.mxu0 0.0
            %1107 = vmatprep.subr.mxu0 0.0
            %1108 = vmatpush2.msra.mxu0 0.0
            %1109 = vmatprep.subr.mxu0 0.0
            %1110 = vmatpush2.msra.mxu0 0.0
            %1111 = vmatprep.subr.mxu0 0.0
            %1112 = vmatpush2.msra.mxu0 0.0
            %1113 = vmatprep.subr.mxu0 0.0
            %1114 = vmatpush2.msra.mxu0 0.0
            %1115 = vmatprep.subr.mxu0 0.0
            %1116 = vmatpush2.msra.mxu0 0.0
            %1117 = vmatprep.subr.mxu0 0.0
            %1118 = vmatpush2.msra.mxu0 0.0
            %1119 = vmatprep.subr.mxu0 0.0
            %1120 = vmatpush2.msra.mxu0 0.0
            %1121 = vmatprep.subr.mxu0 0.0
            %1122 = vmatpush2.msra.mxu0 0.0
            %1123 = vmatprep.subr.mxu0 0.0
            %1124 = vmatpush2.msra.mxu0 0.0
            %1125 = vmatprep.subr.mxu0 0.0
            %1126 = vmatpush2.msra.mxu0 0.0
            %1127 = vmatprep.subr.mxu0 0.0
            %1128 = vmatpush2.msra.mxu0 0.0
            %1129 = vmatprep.subr.mxu0 0.0
            %1130 = vmatpush2.msra.mxu0 0.0
            %1131 = vmatprep.subr.mxu0 0.0
            %1132 = vmatpush2.msra.mxu0 0.0
            %1133 = vmatprep.subr.mxu0 0.0
            %1134 = vmatpush2.msra.mxu0 0.0
            %1135 = vmatprep.mubr.f32.mxu0 0.0
            %1136 = vmatmul.mubr.f32.gmra.mxu0 %v1069
            %v1137 = vpop.f32.mrf.mxu0
            %v1138 = vadd.f32 0.0, %v1137
            %v1139 = vpop.f32.mrf.mxu0
            %v1140 = vadd.f32 0.0, %v1139
            %1141 = vdwg.mxu0
            %v1144 = vcombine.low %v1138, %v1140
            %v1146 = vunpack.c.l.s4 1983009808
            %v1147 = vunpack.c.0.s8 %v1146
            %v1148 = vlaneseq
            %v1149 = vshrl.u32 %v1148, 7
            %v1150 = vsub.s32 %v1147, %v1149
            %v1151 = vrot.slane %v1144, %v1150
            %1153 = vst [vmem:[#allocation3] sm:$0xf] %v1151
          $region68: #{tpu_custom_call.1} parent=63 // pred_fallthru
            _
          %v1154 = vld [vmem:[#allocation3] ss:$2 sm:$0x3]
          %v1156 = vlaneseq
          %v1157 = vshrl.u32 %v1156, 7
          %v1158 = vsub.s32 0, %v1157
          %v1159 = vrot.slane %v1154, %v1158
          %v1160 = vlaneseq
          %v1161 = vshrl.u32 %v1160, 7
          %v1162 = vsub.s32 1, %v1161
          %v1163 = vrot.slane %v1154, %v1162
          %v1166 = vmul.f32 %v364, %v1159
          %v1167 = vmul.f32 %v365, %v1163
          %s1168 = scalar_lea.vmem [#allocation3], 1
          %v1169 = vld [vmem:[%s1168] ss:$2 sm:$0x3]
          %v1171 = vlaneseq
          %v1172 = vshrl.u32 %v1171, 7
          %v1173 = vsub.s32 0, %v1172
          %v1174 = vrot.slane %v1169, %v1173
          %v1175 = vlaneseq
          %v1176 = vshrl.u32 %v1175, 7
          %v1177 = vsub.s32 1, %v1176
          %v1178 = vrot.slane %v1169, %v1177
          %v1181 = vadd.f32 %v1166, %v1174
          %v1182 = vadd.f32 %v1167, %v1178
          %v1183 = vld [vmem:[#allocation10] sm:$0xff]
          %v1184 = vld [vmem:[#allocation10 + $0x8] sm:$0xff]
          %v1185 = vld [vmem:[#allocation10 + $0x10] sm:$0xff]
          %v1186 = vld [vmem:[#allocation10 + $0x18] sm:$0xff]
          %v1187 = vld [vmem:[#allocation10 + $0x20] sm:$0xff]
          %v1188 = vld [vmem:[#allocation10 + $0x28] sm:$0xff]
          %v1189 = vld [vmem:[#allocation10 + $0x30] sm:$0xff]
          %v1190 = vld [vmem:[#allocation10 + $0x38] sm:$0xff]
          %v1191 = vld [vmem:[#allocation10 + $0x40] sm:$0xff]
          %v1192 = vld [vmem:[#allocation10 + $0x48] sm:$0xff]
          %v1193 = vld [vmem:[#allocation10 + $0x50] sm:$0xff]
          %v1194 = vld [vmem:[#allocation10 + $0x58] sm:$0xff]
          %v1195 = vld [vmem:[#allocation10 + $0x60] sm:$0xff]
          %v1196 = vld [vmem:[#allocation10 + $0x68] sm:$0xff]
          %v1197 = vld [vmem:[#allocation10 + $0x70] sm:$0xff]
          %v1198 = vld [vmem:[#allocation10 + $0x78] sm:$0xff]
          %v1199 = vld [vmem:[#allocation10 + $0x80] sm:$0xff]
          %v1200 = vld [vmem:[#allocation10 + $0x88] sm:$0xff]
          %v1201 = vld [vmem:[#allocation10 + $0x90] sm:$0xff]
          %v1202 = vld [vmem:[#allocation10 + $0x98] sm:$0xff]
          %v1203 = vld [vmem:[#allocation10 + $0xa0] sm:$0xff]
          %v1204 = vld [vmem:[#allocation10 + $0xa8] sm:$0xff]
          %v1205 = vld [vmem:[#allocation10 + $0xb0] sm:$0xff]
          %v1206 = vld [vmem:[#allocation10 + $0xb8] sm:$0xff]
          %v1207 = vld [vmem:[#allocation10 + $0xc0] sm:$0xff]
          %v1208 = vld [vmem:[#allocation10 + $0xc8] sm:$0xff]
          %v1209 = vld [vmem:[#allocation10 + $0xd0] sm:$0xff]
          %v1210 = vld [vmem:[#allocation10 + $0xd8] sm:$0xff]
          %v1211 = vld [vmem:[#allocation10 + $0xe0] sm:$0xff]
          %v1212 = vld [vmem:[#allocation10 + $0xe8] sm:$0xff]
          %v1213 = vld [vmem:[#allocation10 + $0xf0] sm:$0xff]
          %v1214 = vld [vmem:[#allocation10 + $0xf8] sm:$0xff]
          %v1215 = vld [vmem:[#allocation9 + $0x3] sm:$0x1]
          %1216 = vmatprep.subr.mxu0 0.0
          %1217 = vmatpush1.msra.mxu0 %v1198
          %1218 = vmatprep.subr.mxu0 0.0
          %1219 = vmatpush1.msra.mxu0 %v1197
          %1220 = vmatprep.subr.mxu0 0.0
          %1221 = vmatpush1.msra.mxu0 %v1196
          %1222 = vmatprep.subr.mxu0 0.0
          %1223 = vmatpush1.msra.mxu0 %v1195
          %1224 = vmatprep.subr.mxu0 0.0
          %1225 = vmatpush1.msra.mxu0 %v1194
          %1226 = vmatprep.subr.mxu0 0.0
          %1227 = vmatpush1.msra.mxu0 %v1193
          %1228 = vmatprep.subr.mxu0 0.0
          %1229 = vmatpush1.msra.mxu0 %v1192
          %1230 = vmatprep.subr.mxu0 0.0
          %1231 = vmatpush1.msra.mxu0 %v1191
          %1232 = vmatprep.subr.mxu0 0.0
          %1233 = vmatpush1.msra.mxu0 %v1190
          %1234 = vmatprep.subr.mxu0 0.0
          %1235 = vmatpush1.msra.mxu0 %v1189
          %1236 = vmatprep.subr.mxu0 0.0
          %1237 = vmatpush1.msra.mxu0 %v1188
          %1238 = vmatprep.subr.mxu0 0.0
          %1239 = vmatpush1.msra.mxu0 %v1187
          %1240 = vmatprep.subr.mxu0 0.0
          %1241 = vmatpush1.msra.mxu0 %v1186
          %1242 = vmatprep.subr.mxu0 0.0
          %1243 = vmatpush1.msra.mxu0 %v1185
          %1244 = vmatprep.subr.mxu0 0.0
          %1245 = vmatpush1.msra.mxu0 %v1184
          %1246 = vmatprep.subr.mxu0 0.0
          %1247 = vmatpush1.msra.mxu0 %v1183
          %1248 = vmatprep.subr.mxu0 0.0
          %1249 = vmatpush2.msra.mxu0 %v1214
          %1250 = vmatprep.subr.mxu0 0.0
          %1251 = vmatpush2.msra.mxu0 %v1213
          %1252 = vmatprep.subr.mxu0 0.0
          %1253 = vmatpush2.msra.mxu0 %v1212
          %1254 = vmatprep.subr.mxu0 0.0
          %1255 = vmatpush2.msra.mxu0 %v1211
          %1256 = vmatprep.subr.mxu0 0.0
          %1257 = vmatpush2.msra.mxu0 %v1210
          %1258 = vmatprep.subr.mxu0 0.0
          %1259 = vmatpush2.msra.mxu0 %v1209
          %1260 = vmatprep.subr.mxu0 0.0
          %1261 = vmatpush2.msra.mxu0 %v1208
          %1262 = vmatprep.subr.mxu0 0.0
          %1263 = vmatpush2.msra.mxu0 %v1207
          %1264 = vmatprep.subr.mxu0 0.0
          %1265 = vmatpush2.msra.mxu0 %v1206
          %1266 = vmatprep.subr.mxu0 0.0
          %1267 = vmatpush2.msra.mxu0 %v1205
          %1268 = vmatprep.subr.mxu0 0.0
          %1269 = vmatpush2.msra.mxu0 %v1204
          %1270 = vmatprep.subr.mxu0 0.0
          %1271 = vmatpush2.msra.mxu0 %v1203
          %1272 = vmatprep.subr.mxu0 0.0
          %1273 = vmatpush2.msra.mxu0 %v1202
          %1274 = vmatprep.subr.mxu0 0.0
          %1275 = vmatpush2.msra.mxu0 %v1201
          %1276 = vmatprep.subr.mxu0 0.0
          %1277 = vmatpush2.msra.mxu0 %v1200
          %1278 = vmatprep.subr.mxu0 0.0
          %1279 = vmatpush2.msra.mxu0 %v1199
          %1280 = vmatprep.mubr.f32.mxu0 %v1182
          %1281 = vmatmul.mubr.f32.gmra.mxu0 %v1181
          %v1282 = vpop.f32.mrf.mxu0
          %v1283 = vadd.f32 %v1215, %v1282
          %v1284 = vpop.f32.mrf.mxu0
          %1285 = vdwg.mxu0
          %v1286 = vmax.f32 %v1283, 0.0
          %1287 = vst [vmem:[%s250] sm:$0x1] %v1286
        $region64: #{tpu_custom_call.1} parent=35 // pred_fallthru
          _
        %s1288 = sand.u32 %s132, 1
        %s1289 = scalar_lea.sflag [#allocation6], %s1288
        %s1290 = sand.u32 %s132, 1
        %s1291 = scalar_lea.vmem [#allocation12], %s1290
        // Predicated region
        $region69: #{tpu_custom_call.1} parent=35 // pred_check
          %p1292 = pneg %p142
        $region70: #{tpu_custom_call.1} parent=35 // pred_check_branch
          %1294 = sbr.rel (%p1292) target = $region72
        $region71: #{tpu_custom_call.1} parent=35 // pred_region
          %s1295 = smul.u32 %s25, %s26
          %s1297 = ssub.s32 16, 16
          %1298 = vsyncadd %s1289, %s1297
          %s1299 = smul.addr %s1295, 16
          %s1300 = scalar_lea.hbm %s4, %s1299
          %s1302 = sshll.u32 %s1291, 4
          %s1303 = int_to_ptr.vmem [resolvable:$true] %s1302
          %1305 = dma.vmem_to_hbm [thread:$0]  %s1303, 16, %s1300, %s1289
        $region72: #{tpu_custom_call.1} parent=35 // pred_fallthru
          _
      $region36: #{tpu_custom_call.1} parent=5 // pred_fallthru
        _
      %p1306 = scmp.le.s32.totalorder 2, %s16
      // Predicated region
      $region73: #{tpu_custom_call.1} parent=5 // pred_check
        %p1307 = pneg %p1306
      $region74: #{tpu_custom_call.1} parent=5 // pred_check_branch
        %1309 = sbr.rel (%p1307) target = $region76
      $region75: #{tpu_custom_call.1} parent=5 // pred_region
        %s1310 = ssub.s32 %s16, 2
        // Predicated region
        $region77: #{tpu_custom_call.1} parent=75 // pred_check
          %p1311 = pneg %p148
        $region78: #{tpu_custom_call.1} parent=75 // pred_check_branch
          %1313 = sbr.rel (%p1311) target = $region80
        $region79: #{tpu_custom_call.1} parent=75 // pred_region
          %s1314 = sand.u32 %s133, 1
          %s1315 = scalar_lea.sflag [#allocation6], %s1314
          %s1316 = sand.u32 %s133, 1
          %s1317 = scalar_lea.vmem [#allocation12], %s1316
          %1318 = dma.done %s1315, 16
        $region80: #{tpu_custom_call.1} parent=75 // pred_fallthru
          _
      $region76: #{tpu_custom_call.1} parent=5 // pred_fallthru
        _
    $region6: #{tpu_custom_call.1} parent=1 // loop_footer
      %s20 = sadd.s32 1, %s16
    $region7: #{tpu_custom_call.1} parent=1 // loop_footer_branch
      %15 = sbr.rel target = $region3
    $region8: #{tpu_custom_call.1} parent=1 // loop_exit
      _
    %1319 = vsyncpa [#allocation5], 1
    %s1320 = scalar_lea.sflag [#allocation5], 1
    %1321 = vsyncpa %s1320, 1
    %1322 = vsyncpa [#allocation8], 1
    %1323 = vsyncpa [#allocation11], 1
    %1324 = vsyncpa [#allocation6], 1
    %s1325 = scalar_lea.sflag [#allocation6], 1
    %1326 = vsyncpa %s1325, 1

</llo_original>
